<compile_context>
chip_gen: v7x
topology: tpu7x:2x2x1
jax: 0.10.0
libtpu: 0.0.40
codegen_flags: <defaults>
</compile_context>

<pallas_src>
import jax
import jax.numpy as jnp
from jax.experimental import pallas as pl
from jax.experimental.pallas import tpu as pltpu


def gru_encoder_kernel(x_ref, pos_ref, wih_ref, whh_ref, bif_ref, bhn_ref,
                       out_ref, hid_ref, gi_ref):
    """Single-invocation GRU encoder (PyTorch gate order r|z|n), time-major."""
    T, B, D_in = x_ref.shape
    H = hid_ref.shape[-1]

    # ---- Phase 1 (non-recurrent): input projection for ALL timesteps at once. ----
    # Inputs arrive time-major [T, B, D_in]; collapse leading dims (layout-preserving)
    # and run one MXU matmul; biases (b_ih + b_hh_{r,z}) are pre-folded in bif.
    inp = (x_ref[...] + pos_ref[...]).reshape(T * B, D_in)          # [T*B, D_in]
    gi_ref[...] = (
        jnp.dot(inp, wih_ref[...], preferred_element_type=jnp.float32)
        + bif_ref[...]
    ).reshape(T, B, 3 * H)                                          # [T, B, 3H] VMEM

    # ---- Hoisted loop invariants (kept out of the serial per-step chain). ----
    whh = whh_ref[...]                                              # [H, 3H]
    bhh_n_b = jnp.broadcast_to(bhn_ref[...], (B, H))                # [B, H], once

    # ---- Phase 2 (recurrent): fully unrolled static time loop, h stays in vregs. ----
    h = jnp.zeros((B, H), jnp.float32)
    for t in range(T):                                              # static -> unrolled
        gi = gi_ref[t]                                              # [B, 3H] dense load
        gh = jnp.dot(h, whh, preferred_element_type=jnp.float32)    # [B, 3H]
        # r and z with a single fused sigmoid over [B, 2H].
        rz = jax.nn.sigmoid(gi[:, :2 * H] + gh[:, :2 * H])
        r = rz[:, :H]
        z = rz[:, H:]
        n = jnp.tanh(gi[:, 2 * H:] + r * (gh[:, 2 * H:] + bhh_n_b))
        h = n + z * (h - n)                                         # == (1-z)*n + z*h
        out_ref[t] = h.astype(out_ref.dtype)                        # one dense vreg store

    hid_ref[...] = h.astype(hid_ref.dtype)                          # written exactly once


def encoder_forward(x, abs_seq, params):
    """x: [B, T, D_in] f32, abs_seq: [B, T] i32 -> (out [B, T, H], hidden [B, H])."""
    B, T, D_in = x.shape
    H = params["whh"].shape[0]

    # Positional-embedding gather is glue (wrapper); time-major layout so the kernel's
    # per-step reads/stores are dense. Both are tiny one-time ops off the serial chain.
    x_t = jnp.swapaxes(x, 0, 1)                                     # [T, B, D_in]
    pos_t = jnp.take(params["pos_table"], abs_seq.T, axis=0)        # [T, B, D_in]

    bih = params["bih"]
    bhh = params["bhh"]
    # Fold b_ih plus the r/z parts of b_hh into the non-recurrent projection bias.
    # Only b_hh_n must remain inside the recurrence (it is scaled by r).
    bias_fold = (bih + jnp.concatenate(
        [bhh[:2 * H], jnp.zeros((H,), bhh.dtype)])).reshape(1, 3 * H)
    bhh_n = bhh[2 * H:].reshape(1, H)

    vmem = pl.BlockSpec(memory_space=pltpu.MemorySpace.VMEM)        # whole array, VMEM
    out_tm, hidden = pl.pallas_call(
        gru_encoder_kernel,
        out_shape=(
            jax.ShapeDtypeStruct((T, B, H), jnp.float32),           # time-major out
            jax.ShapeDtypeStruct((B, H), jnp.float32),
        ),
        in_specs=[vmem, vmem, vmem, vmem, vmem, vmem],
        out_specs=(vmem, vmem),
        scratch_shapes=[pltpu.VMEM((T, B, 3 * H), jnp.float32)],    # gi_all, time-major
    )(x_t, pos_t, params["wih"], params["whh"], bias_fold, bhh_n)

    out = jnp.transpose(out_tm, (1, 0, 2))                          # [B, T, H]
    return out, hidden


def init_params(key, d_in, hidden, max_len):
    k1, k2, k3, k4, k5 = jax.random.split(key, 5)
    scale_i = 1.0 / jnp.sqrt(d_in)
    scale_h = 1.0 / jnp.sqrt(hidden)
    return {
        "wih": jax.random.uniform(k1, (d_in, 3 * hidden), jnp.float32, -scale_i, scale_i),
        "whh": jax.random.uniform(k2, (hidden, 3 * hidden), jnp.float32, -scale_h, scale_h),
        "bih": jax.random.uniform(k3, (3 * hidden,), jnp.float32, -scale_h, scale_h),
        "bhh": jax.random.uniform(k4, (3 * hidden,), jnp.float32, -scale_h, scale_h),
        "pos_table": 0.02 * jax.random.normal(k5, (max_len, d_in), jnp.float32),
    }


def reference_forward(x, abs_seq, params):
    """Pure-JAX reference of the same GRU encoder (sanity check)."""
    B, T, D_in = x.shape
    H = params["whh"].shape[0]
    pos = jnp.take(params["pos_table"], abs_seq, axis=0)
    inp = x + pos

    def step(h, xt):
        gi = xt @ params["wih"] + params["bih"]
        gh = h @ params["whh"] + params["bhh"]
        i_r, i_z, i_n = gi[:, :H], gi[:, H:2 * H], gi[:, 2 * H:]
        h_r, h_z, h_n = gh[:, :H], gh[:, H:2 * H], gh[:, 2 * H:]
        r = jax.nn.sigmoid(i_r + h_r)
        z = jax.nn.sigmoid(i_z + h_z)
        n = jnp.tanh(i_n + r * h_n)
        h_new = (1.0 - z) * n + z * h
        return h_new, h_new

    h0 = jnp.zeros((B, H), jnp.float32)
    h_final, outs = jax.lax.scan(step, h0, jnp.transpose(inp, (1, 0, 2)))
    return jnp.transpose(outs, (1, 0, 2)), h_final


if __name__ == "__main__":
    B, T, D_IN, HID, MAX_LEN = 8, 8, 32, 128, 64

    key = jax.random.PRNGKey(0)
    kx, ks, kp = jax.random.split(key, 3)

    x = jax.random.normal(kx, (B, T, D_IN), jnp.float32)
    abs_seq = jax.random.randint(ks, (B, T), 0, MAX_LEN, jnp.int32)
    params = init_params(kp, D_IN, HID, MAX_LEN)

    out, hidden = encoder_forward(x, abs_seq, params)
    out = jax.block_until_ready(out)
    hidden = jax.block_until_ready(hidden)

    # Sanity check against the pure-JAX reference.
    ref_out, ref_hidden = reference_forward(x, abs_seq, params)
    assert out.shape == (B, T, HID) and hidden.shape == (B, HID)
    assert jnp.allclose(out, ref_out, atol=1e-5, rtol=1e-5)
    assert jnp.allclose(hidden, ref_hidden, atol=1e-5, rtol=1e-5)

    print("KERNEL_OK")
</pallas_src>

<mosaic_0001>
module attributes {stable_mosaic.version = 11 : i64} {
  func.func @gru_encoder_kernel(%arg0: memref<8x8x32xf32, #tpu.memory_space<vmem>>, %arg1: memref<8x8x32xf32, #tpu.memory_space<vmem>>, %arg2: memref<32x384xf32, #tpu.memory_space<vmem>>, %arg3: memref<128x384xf32, #tpu.memory_space<vmem>>, %arg4: memref<1x384xf32, #tpu.memory_space<vmem>>, %arg5: memref<1x128xf32, #tpu.memory_space<vmem>>, %arg6: memref<8x8x128xf32, #tpu.memory_space<vmem>>, %arg7: memref<8x128xf32, #tpu.memory_space<vmem>>, %arg8: memref<8x8x384xf32, #tpu.memory_space<vmem>>) attributes {dimension_semantics = [], scalar_prefetch = 0 : i64, scratch_operands = 1 : i64, tpu.core_type = #tpu.core_type<tc>} {
    %c0 = arith.constant 0 : index
    %c0_0 = arith.constant 0 : index
    %c0_1 = arith.constant 0 : index
    %0 = vector.load %arg0[%c0, %c0_0, %c0_1] : memref<8x8x32xf32, #tpu.memory_space<vmem>>, vector<8x8x32xf32>
    %c0_2 = arith.constant 0 : index
    %c0_3 = arith.constant 0 : index
    %c0_4 = arith.constant 0 : index
    %1 = vector.load %arg1[%c0_2, %c0_3, %c0_4] : memref<8x8x32xf32, #tpu.memory_space<vmem>>, vector<8x8x32xf32>
    %2 = arith.addf %0, %1 : vector<8x8x32xf32>
    %3 = vector.shape_cast %2 : vector<8x8x32xf32> to vector<64x32xf32>
    %c0_5 = arith.constant 0 : index
    %c0_6 = arith.constant 0 : index
    %4 = vector.load %arg2[%c0_5, %c0_6] : memref<32x384xf32, #tpu.memory_space<vmem>>, vector<32x384xf32>
    %cst = arith.constant dense<0.000000e+00> : vector<64x384xf32>
    %5 = tpu.matmul %3, %4, %cst {dimension_numbers = #tpu.dot_dimension_numbers<[1], [0], [0], [1], [0, 0, 1, 1], [], []>} : vector<64x32xf32>, vector<32x384xf32>, vector<64x384xf32> -> vector<64x384xf32>
    %c0_7 = arith.constant 0 : index
    %c0_8 = arith.constant 0 : index
    %6 = vector.load %arg4[%c0_7, %c0_8] : memref<1x384xf32, #tpu.memory_space<vmem>>, vector<1x384xf32>
    %7 = vector.broadcast %6 : vector<1x384xf32> to vector<64x384xf32>
    %8 = arith.addf %5, %7 : vector<64x384xf32>
    %9 = vector.shape_cast %8 : vector<64x384xf32> to vector<8x8x384xf32>
    %c0_9 = arith.constant 0 : index
    %c0_10 = arith.constant 0 : index
    %c0_11 = arith.constant 0 : index
    %10 = vector.load %arg8[%c0_9, %c0_10, %c0_11] : memref<8x8x384xf32, #tpu.memory_space<vmem>>, vector<8x8x384xf32>
    tpu.vector_store %arg8[%c0_9, %c0_10, %c0_11], %9 {strides = array<i32>} : memref<8x8x384xf32, #tpu.memory_space<vmem>>, vector<8x8x384xf32>,
    %c0_12 = arith.constant 0 : index
    %c0_13 = arith.constant 0 : index
    %11 = vector.load %arg3[%c0_12, %c0_13] : memref<128x384xf32, #tpu.memory_space<vmem>>, vector<128x384xf32>
    %c0_14 = arith.constant 0 : index
    %c0_15 = arith.constant 0 : index
    %12 = vector.load %arg5[%c0_14, %c0_15] : memref<1x128xf32, #tpu.memory_space<vmem>>, vector<1x128xf32>
    %13 = vector.shape_cast %12 : vector<1x128xf32> to vector<1x128xf32>
    %14 = vector.broadcast %13 : vector<1x128xf32> to vector<8x128xf32>
    %cst_16 = arith.constant 0.000000e+00 : f32
    %15 = vector.broadcast %cst_16 : f32 to vector<8x128xf32>
    %c0_17 = arith.constant 0 : index
    %c0_18 = arith.constant 0 : index
    %c0_19 = arith.constant 0 : index
    %16 = vector.load %arg8[%c0_17, %c0_18, %c0_19] : memref<8x8x384xf32, #tpu.memory_space<vmem>>, vector<1x8x384xf32>
    %17 = vector.shape_cast %16 : vector<1x8x384xf32> to vector<8x384xf32>
    %cst_20 = arith.constant dense<0.000000e+00> : vector<8x384xf32>
    %18 = tpu.matmul %15, %11, %cst_20 {dimension_numbers = #tpu.dot_dimension_numbers<[1], [0], [0], [1], [0, 0, 1, 1], [], []>} : vector<8x128xf32>, vector<128x384xf32>, vector<8x384xf32> -> vector<8x384xf32>
    %19 = vector.extract_strided_slice %17 {offsets = [0, 0], sizes = [8, 256], strides = [1, 1]} : vector<8x384xf32> to vector<8x256xf32>
    %20 = vector.extract_strided_slice %18 {offsets = [0, 0], sizes = [8, 256], strides = [1, 1]} : vector<8x384xf32> to vector<8x256xf32>
    %21 = arith.addf %19, %20 : vector<8x256xf32>
    %22 = arith.negf %21 : vector<8x256xf32>
    %23 = math.exp %22 : vector<8x256xf32>
    %cst_21 = arith.constant 1.000000e+00 : f32
    %24 = vector.broadcast %cst_21 : f32 to vector<8x256xf32>
    %25 = arith.addf %24, %23 : vector<8x256xf32>
    %26 = arith.divf %24, %25 : vector<8x256xf32>
    %27 = vector.extract_strided_slice %26 {offsets = [0, 0], sizes = [8, 128], strides = [1, 1]} : vector<8x256xf32> to vector<8x128xf32>
    %28 = vector.extract_strided_slice %26 {offsets = [0, 128], sizes = [8, 128], strides = [1, 1]} : vector<8x256xf32> to vector<8x128xf32>
    %29 = vector.extract_strided_slice %17 {offsets = [0, 256], sizes = [8, 128], strides = [1, 1]} : vector<8x384xf32> to vector<8x128xf32>
    %30 = vector.extract_strided_slice %18 {offsets = [0, 256], sizes = [8, 128], strides = [1, 1]} : vector<8x384xf32> to vector<8x128xf32>
    %31 = arith.addf %30, %14 : vector<8x128xf32>
    %32 = arith.mulf %27, %31 : vector<8x128xf32>
    %33 = arith.addf %29, %32 : vector<8x128xf32>
    %34 = math.tanh %33 : vector<8x128xf32>
    %35 = arith.subf %15, %34 : vector<8x128xf32>
    %36 = arith.mulf %28, %35 : vector<8x128xf32>
    %37 = arith.addf %34, %36 : vector<8x128xf32>
    %c0_22 = arith.constant 0 : index
    %c0_23 = arith.constant 0 : index
    %c0_24 = arith.constant 0 : index
    %38 = vector.load %arg6[%c0_22, %c0_23, %c0_24] : memref<8x8x128xf32, #tpu.memory_space<vmem>>, vector<1x8x128xf32>
    %39 = vector.shape_cast %38 : vector<1x8x128xf32> to vector<8x128xf32>
    %40 = vector.shape_cast %37 : vector<8x128xf32> to vector<1x8x128xf32>
    tpu.vector_store %arg6[%c0_22, %c0_23, %c0_24], %40 {strides = array<i32>} : memref<8x8x128xf32, #tpu.memory_space<vmem>>, vector<1x8x128xf32>,
    %c1 = arith.constant 1 : index
    %c0_25 = arith.constant 0 : index
    %c0_26 = arith.constant 0 : index
    %41 = vector.load %arg8[%c1, %c0_25, %c0_26] : memref<8x8x384xf32, #tpu.memory_space<vmem>>, vector<1x8x384xf32>
    %42 = vector.shape_cast %41 : vector<1x8x384xf32> to vector<8x384xf32>
    %cst_27 = arith.constant dense<0.000000e+00> : vector<8x384xf32>
    %43 = tpu.matmul %37, %11, %cst_27 {dimension_numbers = #tpu.dot_dimension_numbers<[1], [0], [0], [1], [0, 0, 1, 1], [], []>} : vector<8x128xf32>, vector<128x384xf32>, vector<8x384xf32> -> vector<8x384xf32>
    %44 = vector.extract_strided_slice %42 {offsets = [0, 0], sizes = [8, 256], strides = [1, 1]} : vector<8x384xf32> to vector<8x256xf32>
    %45 = vector.extract_strided_slice %43 {offsets = [0, 0], sizes = [8, 256], strides = [1, 1]} : vector<8x384xf32> to vector<8x256xf32>
    %46 = arith.addf %44, %45 : vector<8x256xf32>
    %47 = arith.negf %46 : vector<8x256xf32>
    %48 = math.exp %47 : vector<8x256xf32>
    %cst_28 = arith.constant 1.000000e+00 : f32
    %49 = vector.broadcast %cst_28 : f32 to vector<8x256xf32>
    %50 = arith.addf %49, %48 : vector<8x256xf32>
    %51 = arith.divf %49, %50 : vector<8x256xf32>
    %52 = vector.extract_strided_slice %51 {offsets = [0, 0], sizes = [8, 128], strides = [1, 1]} : vector<8x256xf32> to vector<8x128xf32>
    %53 = vector.extract_strided_slice %51 {offsets = [0, 128], sizes = [8, 128], strides = [1, 1]} : vector<8x256xf32> to vector<8x128xf32>
    %54 = vector.extract_strided_slice %42 {offsets = [0, 256], sizes = [8, 128], strides = [1, 1]} : vector<8x384xf32> to vector<8x128xf32>
    %55 = vector.extract_strided_slice %43 {offsets = [0, 256], sizes = [8, 128], strides = [1, 1]} : vector<8x384xf32> to vector<8x128xf32>
    %56 = arith.addf %55, %14 : vector<8x128xf32>
    %57 = arith.mulf %52, %56 : vector<8x128xf32>
    %58 = arith.addf %54, %57 : vector<8x128xf32>
    %59 = math.tanh %58 : vector<8x128xf32>
    %60 = arith.subf %37, %59 : vector<8x128xf32>
    %61 = arith.mulf %53, %60 : vector<8x128xf32>
    %62 = arith.addf %59, %61 : vector<8x128xf32>
    %c1_29 = arith.constant 1 : index
    %c0_30 = arith.constant 0 : index
    %c0_31 = arith.constant 0 : index
    %63 = vector.load %arg6[%c1_29, %c0_30, %c0_31] : memref<8x8x128xf32, #tpu.memory_space<vmem>>, vector<1x8x128xf32>
    %64 = vector.shape_cast %63 : vector<1x8x128xf32> to vector<8x128xf32>
    %65 = vector.shape_cast %62 : vector<8x128xf32> to vector<1x8x128xf32>
    tpu.vector_store %arg6[%c1_29, %c0_30, %c0_31], %65 {strides = array<i32>} : memref<8x8x128xf32, #tpu.memory_space<vmem>>, vector<1x8x128xf32>,
    %c2 = arith.constant 2 : index
    %c0_32 = arith.constant 0 : index
    %c0_33 = arith.constant 0 : index
    %66 = vector.load %arg8[%c2, %c0_32, %c0_33] : memref<8x8x384xf32, #tpu.memory_space<vmem>>, vector<1x8x384xf32>
    %67 = vector.shape_cast %66 : vector<1x8x384xf32> to vector<8x384xf32>
    %cst_34 = arith.constant dense<0.000000e+00> : vector<8x384xf32>
    %68 = tpu.matmul %62, %11, %cst_34 {dimension_numbers = #tpu.dot_dimension_numbers<[1], [0], [0], [1], [0, 0, 1, 1], [], []>} : vector<8x128xf32>, vector<128x384xf32>, vector<8x384xf32> -> vector<8x384xf32>
    %69 = vector.extract_strided_slice %67 {offsets = [0, 0], sizes = [8, 256], strides = [1, 1]} : vector<8x384xf32> to vector<8x256xf32>
    %70 = vector.extract_strided_slice %68 {offsets = [0, 0], sizes = [8, 256], strides = [1, 1]} : vector<8x384xf32> to vector<8x256xf32>
    %71 = arith.addf %69, %70 : vector<8x256xf32>
    %72 = arith.negf %71 : vector<8x256xf32>
    %73 = math.exp %72 : vector<8x256xf32>
    %cst_35 = arith.constant 1.000000e+00 : f32
    %74 = vector.broadcast %cst_35 : f32 to vector<8x256xf32>
    %75 = arith.addf %74, %73 : vector<8x256xf32>
    %76 = arith.divf %74, %75 : vector<8x256xf32>
    %77 = vector.extract_strided_slice %76 {offsets = [0, 0], sizes = [8, 128], strides = [1, 1]} : vector<8x256xf32> to vector<8x128xf32>
    %78 = vector.extract_strided_slice %76 {offsets = [0, 128], sizes = [8, 128], strides = [1, 1]} : vector<8x256xf32> to vector<8x128xf32>
    %79 = vector.extract_strided_slice %67 {offsets = [0, 256], sizes = [8, 128], strides = [1, 1]} : vector<8x384xf32> to vector<8x128xf32>
    %80 = vector.extract_strided_slice %68 {offsets = [0, 256], sizes = [8, 128], strides = [1, 1]} : vector<8x384xf32> to vector<8x128xf32>
    %81 = arith.addf %80, %14 : vector<8x128xf32>
    %82 = arith.mulf %77, %81 : vector<8x128xf32>
    %83 = arith.addf %79, %82 : vector<8x128xf32>
    %84 = math.tanh %83 : vector<8x128xf32>
    %85 = arith.subf %62, %84 : vector<8x128xf32>
    %86 = arith.mulf %78, %85 : vector<8x128xf32>
    %87 = arith.addf %84, %86 : vector<8x128xf32>
    %c2_36 = arith.constant 2 : index
    %c0_37 = arith.constant 0 : index
    %c0_38 = arith.constant 0 : index
    %88 = vector.load %arg6[%c2_36, %c0_37, %c0_38] : memref<8x8x128xf32, #tpu.memory_space<vmem>>, vector<1x8x128xf32>
    %89 = vector.shape_cast %88 : vector<1x8x128xf32> to vector<8x128xf32>
    %90 = vector.shape_cast %87 : vector<8x128xf32> to vector<1x8x128xf32>
    tpu.vector_store %arg6[%c2_36, %c0_37, %c0_38], %90 {strides = array<i32>} : memref<8x8x128xf32, #tpu.memory_space<vmem>>, vector<1x8x128xf32>,
    %c3 = arith.constant 3 : index
    %c0_39 = arith.constant 0 : index
    %c0_40 = arith.constant 0 : index
    %91 = vector.load %arg8[%c3, %c0_39, %c0_40] : memref<8x8x384xf32, #tpu.memory_space<vmem>>, vector<1x8x384xf32>
    %92 = vector.shape_cast %91 : vector<1x8x384xf32> to vector<8x384xf32>
    %cst_41 = arith.constant dense<0.000000e+00> : vector<8x384xf32>
    %93 = tpu.matmul %87, %11, %cst_41 {dimension_numbers = #tpu.dot_dimension_numbers<[1], [0], [0], [1], [0, 0, 1, 1], [], []>} : vector<8x128xf32>, vector<128x384xf32>, vector<8x384xf32> -> vector<8x384xf32>
    %94 = vector.extract_strided_slice %92 {offsets = [0, 0], sizes = [8, 256], strides = [1, 1]} : vector<8x384xf32> to vector<8x256xf32>
    %95 = vector.extract_strided_slice %93 {offsets = [0, 0], sizes = [8, 256], strides = [1, 1]} : vector<8x384xf32> to vector<8x256xf32>
    %96 = arith.addf %94, %95 : vector<8x256xf32>
    %97 = arith.negf %96 : vector<8x256xf32>
    %98 = math.exp %97 : vector<8x256xf32>
    %cst_42 = arith.constant 1.000000e+00 : f32
    %99 = vector.broadcast %cst_42 : f32 to vector<8x256xf32>
    %100 = arith.addf %99, %98 : vector<8x256xf32>
    %101 = arith.divf %99, %100 : vector<8x256xf32>
    %102 = vector.extract_strided_slice %101 {offsets = [0, 0], sizes = [8, 128], strides = [1, 1]} : vector<8x256xf32> to vector<8x128xf32>
    %103 = vector.extract_strided_slice %101 {offsets = [0, 128], sizes = [8, 128], strides = [1, 1]} : vector<8x256xf32> to vector<8x128xf32>
    %104 = vector.extract_strided_slice %92 {offsets = [0, 256], sizes = [8, 128], strides = [1, 1]} : vector<8x384xf32> to vector<8x128xf32>
    %105 = vector.extract_strided_slice %93 {offsets = [0, 256], sizes = [8, 128], strides = [1, 1]} : vector<8x384xf32> to vector<8x128xf32>
    %106 = arith.addf %105, %14 : vector<8x128xf32>
    %107 = arith.mulf %102, %106 : vector<8x128xf32>
    %108 = arith.addf %104, %107 : vector<8x128xf32>
    %109 = math.tanh %108 : vector<8x128xf32>
    %110 = arith.subf %87, %109 : vector<8x128xf32>
    %111 = arith.mulf %103, %110 : vector<8x128xf32>
    %112 = arith.addf %109, %111 : vector<8x128xf32>
    %c3_43 = arith.constant 3 : index
    %c0_44 = arith.constant 0 : index
    %c0_45 = arith.constant 0 : index
    %113 = vector.load %arg6[%c3_43, %c0_44, %c0_45] : memref<8x8x128xf32, #tpu.memory_space<vmem>>, vector<1x8x128xf32>
    %114 = vector.shape_cast %113 : vector<1x8x128xf32> to vector<8x128xf32>
    %115 = vector.shape_cast %112 : vector<8x128xf32> to vector<1x8x128xf32>
    tpu.vector_store %arg6[%c3_43, %c0_44, %c0_45], %115 {strides = array<i32>} : memref<8x8x128xf32, #tpu.memory_space<vmem>>, vector<1x8x128xf32>,
    %c4 = arith.constant 4 : index
    %c0_46 = arith.constant 0 : index
    %c0_47 = arith.constant 0 : index
    %116 = vector.load %arg8[%c4, %c0_46, %c0_47] : memref<8x8x384xf32, #tpu.memory_space<vmem>>, vector<1x8x384xf32>
    %117 = vector.shape_cast %116 : vector<1x8x384xf32> to vector<8x384xf32>
    %cst_48 = arith.constant dense<0.000000e+00> : vector<8x384xf32>
    %118 = tpu.matmul %112, %11, %cst_48 {dimension_numbers = #tpu.dot_dimension_numbers<[1], [0], [0], [1], [0, 0, 1, 1], [], []>} : vector<8x128xf32>, vector<128x384xf32>, vector<8x384xf32> -> vector<8x384xf32>
    %119 = vector.extract_strided_slice %117 {offsets = [0, 0], sizes = [8, 256], strides = [1, 1]} : vector<8x384xf32> to vector<8x256xf32>
    %120 = vector.extract_strided_slice %118 {offsets = [0, 0], sizes = [8, 256], strides = [1, 1]} : vector<8x384xf32> to vector<8x256xf32>
    %121 = arith.addf %119, %120 : vector<8x256xf32>
    %122 = arith.negf %121 : vector<8x256xf32>
    %123 = math.exp %122 : vector<8x256xf32>
    %cst_49 = arith.constant 1.000000e+00 : f32
    %124 = vector.broadcast %cst_49 : f32 to vector<8x256xf32>
    %125 = arith.addf %124, %123 : vector<8x256xf32>
    %126 = arith.divf %124, %125 : vector<8x256xf32>
    %127 = vector.extract_strided_slice %126 {offsets = [0, 0], sizes = [8, 128], strides = [1, 1]} : vector<8x256xf32> to vector<8x128xf32>
    %128 = vector.extract_strided_slice %126 {offsets = [0, 128], sizes = [8, 128], strides = [1, 1]} : vector<8x256xf32> to vector<8x128xf32>
    %129 = vector.extract_strided_slice %117 {offsets = [0, 256], sizes = [8, 128], strides = [1, 1]} : vector<8x384xf32> to vector<8x128xf32>
    %130 = vector.extract_strided_slice %118 {offsets = [0, 256], sizes = [8, 128], strides = [1, 1]} : vector<8x384xf32> to vector<8x128xf32>
    %131 = arith.addf %130, %14 : vector<8x128xf32>
    %132 = arith.mulf %127, %131 : vector<8x128xf32>
    %133 = arith.addf %129, %132 : vector<8x128xf32>
    %134 = math.tanh %133 : vector<8x128xf32>
    %135 = arith.subf %112, %134 : vector<8x128xf32>
    %136 = arith.mulf %128, %135 : vector<8x128xf32>
    %137 = arith.addf %134, %136 : vector<8x128xf32>
    %c4_50 = arith.constant 4 : index
    %c0_51 = arith.constant 0 : index
    %c0_52 = arith.constant 0 : index
    %138 = vector.load %arg6[%c4_50, %c0_51, %c0_52] : memref<8x8x128xf32, #tpu.memory_space<vmem>>, vector<1x8x128xf32>
    %139 = vector.shape_cast %138 : vector<1x8x128xf32> to vector<8x128xf32>
    %140 = vector.shape_cast %137 : vector<8x128xf32> to vector<1x8x128xf32>
    tpu.vector_store %arg6[%c4_50, %c0_51, %c0_52], %140 {strides = array<i32>} : memref<8x8x128xf32, #tpu.memory_space<vmem>>, vector<1x8x128xf32>,
    %c5 = arith.constant 5 : index
    %c0_53 = arith.constant 0 : index
    %c0_54 = arith.constant 0 : index
    %141 = vector.load %arg8[%c5, %c0_53, %c0_54] : memref<8x8x384xf32, #tpu.memory_space<vmem>>, vector<1x8x384xf32>
    %142 = vector.shape_cast %141 : vector<1x8x384xf32> to vector<8x384xf32>
    %cst_55 = arith.constant dense<0.000000e+00> : vector<8x384xf32>
    %143 = tpu.matmul %137, %11, %cst_55 {dimension_numbers = #tpu.dot_dimension_numbers<[1], [0], [0], [1], [0, 0, 1, 1], [], []>} : vector<8x128xf32>, vector<128x384xf32>, vector<8x384xf32> -> vector<8x384xf32>
    %144 = vector.extract_strided_slice %142 {offsets = [0, 0], sizes = [8, 256], strides = [1, 1]} : vector<8x384xf32> to vector<8x256xf32>
    %145 = vector.extract_strided_slice %143 {offsets = [0, 0], sizes = [8, 256], strides = [1, 1]} : vector<8x384xf32> to vector<8x256xf32>
    %146 = arith.addf %144, %145 : vector<8x256xf32>
    %147 = arith.negf %146 : vector<8x256xf32>
    %148 = math.exp %147 : vector<8x256xf32>
    %cst_56 = arith.constant 1.000000e+00 : f32
    %149 = vector.broadcast %cst_56 : f32 to vector<8x256xf32>
    %150 = arith.addf %149, %148 : vector<8x256xf32>
    %151 = arith.divf %149, %150 : vector<8x256xf32>
    %152 = vector.extract_strided_slice %151 {offsets = [0, 0], sizes = [8, 128], strides = [1, 1]} : vector<8x256xf32> to vector<8x128xf32>
    %153 = vector.extract_strided_slice %151 {offsets = [0, 128], sizes = [8, 128], strides = [1, 1]} : vector<8x256xf32> to vector<8x128xf32>
    %154 = vector.extract_strided_slice %142 {offsets = [0, 256], sizes = [8, 128], strides = [1, 1]} : vector<8x384xf32> to vector<8x128xf32>
    %155 = vector.extract_strided_slice %143 {offsets = [0, 256], sizes = [8, 128], strides = [1, 1]} : vector<8x384xf32> to vector<8x128xf32>
    %156 = arith.addf %155, %14 : vector<8x128xf32>
    %157 = arith.mulf %152, %156 : vector<8x128xf32>
    %158 = arith.addf %154, %157 : vector<8x128xf32>
    %159 = math.tanh %158 : vector<8x128xf32>
    %160 = arith.subf %137, %159 : vector<8x128xf32>
    %161 = arith.mulf %153, %160 : vector<8x128xf32>
    %162 = arith.addf %159, %161 : vector<8x128xf32>
    %c5_57 = arith.constant 5 : index
    %c0_58 = arith.constant 0 : index
    %c0_59 = arith.constant 0 : index
    %163 = vector.load %arg6[%c5_57, %c0_58, %c0_59] : memref<8x8x128xf32, #tpu.memory_space<vmem>>, vector<1x8x128xf32>
    %164 = vector.shape_cast %163 : vector<1x8x128xf32> to vector<8x128xf32>
    %165 = vector.shape_cast %162 : vector<8x128xf32> to vector<1x8x128xf32>
    tpu.vector_store %arg6[%c5_57, %c0_58, %c0_59], %165 {strides = array<i32>} : memref<8x8x128xf32, #tpu.memory_space<vmem>>, vector<1x8x128xf32>,
    %c6 = arith.constant 6 : index
    %c0_60 = arith.constant 0 : index
    %c0_61 = arith.constant 0 : index
    %166 = vector.load %arg8[%c6, %c0_60, %c0_61] : memref<8x8x384xf32, #tpu.memory_space<vmem>>, vector<1x8x384xf32>
    %167 = vector.shape_cast %166 : vector<1x8x384xf32> to vector<8x384xf32>
    %cst_62 = arith.constant dense<0.000000e+00> : vector<8x384xf32>
    %168 = tpu.matmul %162, %11, %cst_62 {dimension_numbers = #tpu.dot_dimension_numbers<[1], [0], [0], [1], [0, 0, 1, 1], [], []>} : vector<8x128xf32>, vector<128x384xf32>, vector<8x384xf32> -> vector<8x384xf32>
    %169 = vector.extract_strided_slice %167 {offsets = [0, 0], sizes = [8, 256], strides = [1, 1]} : vector<8x384xf32> to vector<8x256xf32>
    %170 = vector.extract_strided_slice %168 {offsets = [0, 0], sizes = [8, 256], strides = [1, 1]} : vector<8x384xf32> to vector<8x256xf32>
    %171 = arith.addf %169, %170 : vector<8x256xf32>
    %172 = arith.negf %171 : vector<8x256xf32>
    %173 = math.exp %172 : vector<8x256xf32>
    %cst_63 = arith.constant 1.000000e+00 : f32
    %174 = vector.broadcast %cst_63 : f32 to vector<8x256xf32>
    %175 = arith.addf %174, %173 : vector<8x256xf32>
    %176 = arith.divf %174, %175 : vector<8x256xf32>
    %177 = vector.extract_strided_slice %176 {offsets = [0, 0], sizes = [8, 128], strides = [1, 1]} : vector<8x256xf32> to vector<8x128xf32>
    %178 = vector.extract_strided_slice %176 {offsets = [0, 128], sizes = [8, 128], strides = [1, 1]} : vector<8x256xf32> to vector<8x128xf32>
    %179 = vector.extract_strided_slice %167 {offsets = [0, 256], sizes = [8, 128], strides = [1, 1]} : vector<8x384xf32> to vector<8x128xf32>
    %180 = vector.extract_strided_slice %168 {offsets = [0, 256], sizes = [8, 128], strides = [1, 1]} : vector<8x384xf32> to vector<8x128xf32>
    %181 = arith.addf %180, %14 : vector<8x128xf32>
    %182 = arith.mulf %177, %181 : vector<8x128xf32>
    %183 = arith.addf %179, %182 : vector<8x128xf32>
    %184 = math.tanh %183 : vector<8x128xf32>
    %185 = arith.subf %162, %184 : vector<8x128xf32>
    %186 = arith.mulf %178, %185 : vector<8x128xf32>
    %187 = arith.addf %184, %186 : vector<8x128xf32>
    %c6_64 = arith.constant 6 : index
    %c0_65 = arith.constant 0 : index
    %c0_66 = arith.constant 0 : index
    %188 = vector.load %arg6[%c6_64, %c0_65, %c0_66] : memref<8x8x128xf32, #tpu.memory_space<vmem>>, vector<1x8x128xf32>
    %189 = vector.shape_cast %188 : vector<1x8x128xf32> to vector<8x128xf32>
    %190 = vector.shape_cast %187 : vector<8x128xf32> to vector<1x8x128xf32>
    tpu.vector_store %arg6[%c6_64, %c0_65, %c0_66], %190 {strides = array<i32>} : memref<8x8x128xf32, #tpu.memory_space<vmem>>, vector<1x8x128xf32>,
    %c7 = arith.constant 7 : index
    %c0_67 = arith.constant 0 : index
    %c0_68 = arith.constant 0 : index
    %191 = vector.load %arg8[%c7, %c0_67, %c0_68] : memref<8x8x384xf32, #tpu.memory_space<vmem>>, vector<1x8x384xf32>
    %192 = vector.shape_cast %191 : vector<1x8x384xf32> to vector<8x384xf32>
    %cst_69 = arith.constant dense<0.000000e+00> : vector<8x384xf32>
    %193 = tpu.matmul %187, %11, %cst_69 {dimension_numbers = #tpu.dot_dimension_numbers<[1], [0], [0], [1], [0, 0, 1, 1], [], []>} : vector<8x128xf32>, vector<128x384xf32>, vector<8x384xf32> -> vector<8x384xf32>
    %194 = vector.extract_strided_slice %192 {offsets = [0, 0], sizes = [8, 256], strides = [1, 1]} : vector<8x384xf32> to vector<8x256xf32>
    %195 = vector.extract_strided_slice %193 {offsets = [0, 0], sizes = [8, 256], strides = [1, 1]} : vector<8x384xf32> to vector<8x256xf32>
    %196 = arith.addf %194, %195 : vector<8x256xf32>
    %197 = arith.negf %196 : vector<8x256xf32>
    %198 = math.exp %197 : vector<8x256xf32>
    %cst_70 = arith.constant 1.000000e+00 : f32
    %199 = vector.broadcast %cst_70 : f32 to vector<8x256xf32>
    %200 = arith.addf %199, %198 : vector<8x256xf32>
    %201 = arith.divf %199, %200 : vector<8x256xf32>
    %202 = vector.extract_strided_slice %201 {offsets = [0, 0], sizes = [8, 128], strides = [1, 1]} : vector<8x256xf32> to vector<8x128xf32>
    %203 = vector.extract_strided_slice %201 {offsets = [0, 128], sizes = [8, 128], strides = [1, 1]} : vector<8x256xf32> to vector<8x128xf32>
    %204 = vector.extract_strided_slice %192 {offsets = [0, 256], sizes = [8, 128], strides = [1, 1]} : vector<8x384xf32> to vector<8x128xf32>
    %205 = vector.extract_strided_slice %193 {offsets = [0, 256], sizes = [8, 128], strides = [1, 1]} : vector<8x384xf32> to vector<8x128xf32>
    %206 = arith.addf %205, %14 : vector<8x128xf32>
    %207 = arith.mulf %202, %206 : vector<8x128xf32>
    %208 = arith.addf %204, %207 : vector<8x128xf32>
    %209 = math.tanh %208 : vector<8x128xf32>
    %210 = arith.subf %187, %209 : vector<8x128xf32>
    %211 = arith.mulf %203, %210 : vector<8x128xf32>
    %212 = arith.addf %209, %211 : vector<8x128xf32>
    %c7_71 = arith.constant 7 : index
    %c0_72 = arith.constant 0 : index
    %c0_73 = arith.constant 0 : index
    %213 = vector.load %arg6[%c7_71, %c0_72, %c0_73] : memref<8x8x128xf32, #tpu.memory_space<vmem>>, vector<1x8x128xf32>
    %214 = vector.shape_cast %213 : vector<1x8x128xf32> to vector<8x128xf32>
    %215 = vector.shape_cast %212 : vector<8x128xf32> to vector<1x8x128xf32>
    tpu.vector_store %arg6[%c7_71, %c0_72, %c0_73], %215 {strides = array<i32>} : memref<8x8x128xf32, #tpu.memory_space<vmem>>, vector<1x8x128xf32>,
    %c0_74 = arith.constant 0 : index
    %c0_75 = arith.constant 0 : index
    %216 = vector.load %arg7[%c0_74, %c0_75] : memref<8x128xf32, #tpu.memory_space<vmem>>, vector<8x128xf32>
    tpu.vector_store %arg7[%c0_74, %c0_75], %212 {strides = array<i32>} : memref<8x128xf32, #tpu.memory_space<vmem>>, vector<8x128xf32>,
    return
  }
}

</mosaic_0001>

<llo_original>
// kernel: tpu_custom_call.1
$region0: #{tpu_custom_call.1}
  #allocation0 [shape = 'u32[]', space=smem, size = 0x4, offset = 0x4, fixed_abs, tag = 'smem constant byte address 0x4 - core index']
  #allocation1 [shape = 'u32[144,128]{1,0:T(1,128)}', space=vmem, size = 0x12000, scoped, tag = 'internal scratch']
  #allocation2 [shape = 'f32[8,8,384]{2,1,0:T(8,128)}', space=vmem, size = 0x18000, scoped, tag = 'scratch operand']
  %s0 = inlined_call_operand.hbm [shape: f32[8,8,32], index: 0, kind: input, shape index: {}]
  %s1 = inlined_call_operand.hbm [shape: f32[8,8,32], index: 1, kind: input, shape index: {}]
  %s2 = inlined_call_operand.hbm [shape: f32[32,384], index: 2, kind: input, shape index: {}]
  %s3 = inlined_call_operand.hbm [shape: f32[128,384], index: 3, kind: input, shape index: {}]
  %s4 = inlined_call_operand.vmem [shape: f32[1,384], index: 4, kind: input, shape index: {}]
  %s5 = inlined_call_operand.vmem [shape: f32[1,128], index: 5, kind: input, shape index: {}]
  %s6 = inlined_call_operand.hbm [shape: f32[8,8,128], index: 6, kind: output, shape index: {0}]
  %s7 = inlined_call_operand.hbm [shape: f32[8,128], index: 7, kind: output, shape index: {1}]
  %8 = xla_tuple %s6, %s7
  %s9 = sld [smem:[#allocation0]]
  $region58: #{tpu_custom_call.1} parent=0
    _
  %s11 = ssub.s32 1, %s9
  %s12 = scalar_select 0, %s11, %s9
  $region1: #{tpu_custom_call.1} parent=0
    #allocation3 [shape = 'u8[32768]{0}', space=vmem, size = 0x8000, scoped, tag = 'input window, operand 0, single buffered']
    #allocation4 [shape = 's32[1]{0}', space=sflag, size = 0x4, scoped, tag = 'scoped memory for tpu_custom_call.1']
    #allocation5 [shape = 's32[1]{0}', space=sflag, size = 0x4, scoped, tag = 'scoped memory for tpu_custom_call.1']
    #allocation6 [shape = 'u8[32768]{0}', space=vmem, size = 0x8000, scoped, tag = 'input window, operand 1, single buffered']
    #allocation7 [shape = 's32[1]{0}', space=sflag, size = 0x4, scoped, tag = 'scoped memory for tpu_custom_call.1']
    #allocation8 [shape = 'u8[49152]{0}', space=vmem, size = 0xc000, scoped, tag = 'input window, operand 2, single buffered']
    #allocation9 [shape = 'u8[196608]{0}', space=vmem, size = 0x30000, scoped, tag = 'input window, operand 3, single buffered']
    #allocation10 [shape = 's32[1]{0}', space=sflag, size = 0x4, scoped, tag = 'scoped memory for tpu_custom_call.1']
    #allocation11 [shape = 'u8[32768]{0}', space=vmem, size = 0x8000, scoped, tag = 'output window, operand 0, single buffered']
    #allocation12 [shape = 'u8[4096]{0}', space=vmem, size = 0x1000, scoped, tag = 'output window, operand 1, single buffered']
    #allocation13 [shape = 's32[1]{0}', space=sflag, size = 0x4, scoped, tag = 'scoped memory for tpu_custom_call.1']
    %13 = vsyncpa [#allocation4], 0
    %14 = vsyncpa [#allocation7], 0
    %15 = vsyncpa [#allocation10], 0
    %16 = vsyncpa [#allocation5], 0
    %17 = vsyncpa [#allocation13], 0
    // Predicated region
    $region2: #{tpu_custom_call.1} parent=1 // pred_check
      _
    $region3: #{tpu_custom_call.1} parent=1 // pred_check_branch
      %19 = sbr.rel (0) target = $region5
    $region4: #{tpu_custom_call.1} parent=1 // pred_region
      %s21 = ssub.s32 1024, 1024
      %22 = vsyncadd [#allocation4], %s21
      %s23 = sshll.u32 [#allocation3], 4
      %s24 = int_to_ptr.vmem [resolvable:$true] %s23
      %29 = dma.hbm_to_vmem [thread:$0]  %s0, 1024, %s24, [#allocation4], 128, 128, 8
    $region5: #{tpu_custom_call.1} parent=1 // pred_fallthru
      _
    // Predicated region
    $region6: #{tpu_custom_call.1} parent=1 // pred_check
      _
    $region7: #{tpu_custom_call.1} parent=1 // pred_check_branch
      %31 = sbr.rel (0) target = $region9
    $region8: #{tpu_custom_call.1} parent=1 // pred_region
      %s33 = ssub.s32 1024, 1024
      %34 = vsyncadd [#allocation7], %s33
      %s35 = sshll.u32 [#allocation6], 4
      %s36 = int_to_ptr.vmem [resolvable:$true] %s35
      %41 = dma.hbm_to_vmem [thread:$0]  %s1, 1024, %s36, [#allocation7], 128, 128, 8
    $region9: #{tpu_custom_call.1} parent=1 // pred_fallthru
      _
    // Predicated region
    $region10: #{tpu_custom_call.1} parent=1 // pred_check
      _
    $region11: #{tpu_custom_call.1} parent=1 // pred_check_branch
      %43 = sbr.rel (0) target = $region13
    $region12: #{tpu_custom_call.1} parent=1 // pred_region
      %s45 = ssub.s32 1536, 1536
      %46 = vsyncadd [#allocation7], %s45
      %s47 = sshll.u32 [#allocation8], 4
      %s48 = int_to_ptr.vmem [resolvable:$true] %s47
      %53 = dma.hbm_to_vmem [thread:$0]  %s2, 1536, %s48, [#allocation7], 384, 384, 24
    $region13: #{tpu_custom_call.1} parent=1 // pred_fallthru
      _
    // Predicated region
    $region14: #{tpu_custom_call.1} parent=1 // pred_check
      _
    $region15: #{tpu_custom_call.1} parent=1 // pred_check_branch
      %55 = sbr.rel (0) target = $region17
    $region16: #{tpu_custom_call.1} parent=1 // pred_region
      %s57 = ssub.s32 6144, 6144
      %58 = vsyncadd [#allocation10], %s57
      %s59 = sshll.u32 [#allocation9], 4
      %s60 = int_to_ptr.vmem [resolvable:$true] %s59
      %65 = dma.hbm_to_vmem [thread:$0]  %s3, 6144, %s60, [#allocation10], 384, 384, 24
    $region17: #{tpu_custom_call.1} parent=1 // pred_fallthru
      _
    // Predicated region
    $region18: #{tpu_custom_call.1} parent=1 // pred_check
      _
    $region19: #{tpu_custom_call.1} parent=1 // pred_check_branch
      %67 = sbr.rel (0) target = $region21
    $region20: #{tpu_custom_call.1} parent=1 // pred_region
      _
    $region21: #{tpu_custom_call.1} parent=1 // pred_fallthru
      _
    // Predicated region
    $region22: #{tpu_custom_call.1} parent=1 // pred_check
      _
    $region23: #{tpu_custom_call.1} parent=1 // pred_check_branch
      %69 = sbr.rel (0) target = $region25
    $region24: #{tpu_custom_call.1} parent=1 // pred_region
      _
    $region25: #{tpu_custom_call.1} parent=1 // pred_fallthru
      _
    // Predicated region
    $region26: #{tpu_custom_call.1} parent=1 // pred_check
      _
    $region27: #{tpu_custom_call.1} parent=1 // pred_check_branch
      %71 = sbr.rel (0) target = $region29
    $region28: #{tpu_custom_call.1} parent=1 // pred_region
      %72 = dma.done [#allocation4], 1024
    $region29: #{tpu_custom_call.1} parent=1 // pred_fallthru
      _
    // Predicated region
    $region30: #{tpu_custom_call.1} parent=1 // pred_check
      _
    $region31: #{tpu_custom_call.1} parent=1 // pred_check_branch
      %74 = sbr.rel (0) target = $region33
    $region32: #{tpu_custom_call.1} parent=1 // pred_region
      %75 = dma.done [#allocation7], 1024
    $region33: #{tpu_custom_call.1} parent=1 // pred_fallthru
      _
    // Predicated region
    $region34: #{tpu_custom_call.1} parent=1 // pred_check
      _
    $region35: #{tpu_custom_call.1} parent=1 // pred_check_branch
      %77 = sbr.rel (0) target = $region37
    $region36: #{tpu_custom_call.1} parent=1 // pred_region
      %78 = dma.done [#allocation7], 1536
    $region37: #{tpu_custom_call.1} parent=1 // pred_fallthru
      _
    // Predicated region
    $region38: #{tpu_custom_call.1} parent=1 // pred_check
      _
    $region39: #{tpu_custom_call.1} parent=1 // pred_check_branch
      %80 = sbr.rel (0) target = $region41
    $region40: #{tpu_custom_call.1} parent=1 // pred_region
      %81 = dma.done [#allocation10], 6144
    $region41: #{tpu_custom_call.1} parent=1 // pred_fallthru
      _
    %v82 = vld [vmem:[#allocation3] sm:$0xff]
    %v83 = vld [vmem:[#allocation3 + $0x8] sm:$0xff]
    %v84 = vld [vmem:[#allocation3 + $0x10] sm:$0xff]
    %v85 = vld [vmem:[#allocation3 + $0x18] sm:$0xff]
    %v86 = vld [vmem:[#allocation3 + $0x20] sm:$0xff]
    %v87 = vld [vmem:[#allocation3 + $0x28] sm:$0xff]
    %v88 = vld [vmem:[#allocation3 + $0x30] sm:$0xff]
    %v89 = vld [vmem:[#allocation3 + $0x38] sm:$0xff]
    %v90 = vld [vmem:[#allocation6] sm:$0xff]
    %v91 = vld [vmem:[#allocation6 + $0x8] sm:$0xff]
    %v92 = vld [vmem:[#allocation6 + $0x10] sm:$0xff]
    %v93 = vld [vmem:[#allocation6 + $0x18] sm:$0xff]
    %v94 = vld [vmem:[#allocation6 + $0x20] sm:$0xff]
    %v95 = vld [vmem:[#allocation6 + $0x28] sm:$0xff]
    %v96 = vld [vmem:[#allocation6 + $0x30] sm:$0xff]
    %v97 = vld [vmem:[#allocation6 + $0x38] sm:$0xff]
    %v98 = vadd.f32 %v82, %v90
    %v99 = vadd.f32 %v83, %v91
    %v100 = vadd.f32 %v84, %v92
    %v101 = vadd.f32 %v85, %v93
    %v102 = vadd.f32 %v86, %v94
    %v103 = vadd.f32 %v87, %v95
    %v104 = vadd.f32 %v88, %v96
    %v105 = vadd.f32 %v89, %v97
    %v106 = vld [vmem:[#allocation8] sm:$0xff]
    %v107 = vld [vmem:[#allocation8 + $0x8] sm:$0xff]
    %v108 = vld [vmem:[#allocation8 + $0x10] sm:$0xff]
    %v109 = vld [vmem:[#allocation8 + $0x18] sm:$0xff]
    %v110 = vld [vmem:[#allocation8 + $0x20] sm:$0xff]
    %v111 = vld [vmem:[#allocation8 + $0x28] sm:$0xff]
    %v112 = vld [vmem:[#allocation8 + $0x30] sm:$0xff]
    %v113 = vld [vmem:[#allocation8 + $0x38] sm:$0xff]
    %v114 = vld [vmem:[#allocation8 + $0x40] sm:$0xff]
    %v115 = vld [vmem:[#allocation8 + $0x48] sm:$0xff]
    %v116 = vld [vmem:[#allocation8 + $0x50] sm:$0xff]
    %v117 = vld [vmem:[#allocation8 + $0x58] sm:$0xff]
    %v118 = vld [vmem:[%s4] sm:$0x7]
    %v120 = vlaneseq
    %v121 = vshrl.u32 %v120, 7
    %v122 = vsub.s32 0, %v121
    %v123 = vrot.slane %v118, %v122
    %v124 = vlaneseq
    %v125 = vshrl.u32 %v124, 7
    %v126 = vsub.s32 1, %v125
    %v127 = vrot.slane %v118, %v126
    %v128 = vlaneseq
    %v129 = vshrl.u32 %v128, 7
    %v130 = vsub.s32 2, %v129
    %v131 = vrot.slane %v118, %v130
    %vm135 = vcmask 261120
    %v137 = vsel %vm135, %v98, 0
    %v140 = vsel %vm135, %v99, 0
    %v143 = vsel %vm135, %v100, 0
    %v146 = vsel %vm135, %v101, 0
    %v149 = vsel %vm135, %v102, 0
    %v152 = vsel %vm135, %v103, 0
    %v155 = vsel %vm135, %v104, 0
    %v158 = vsel %vm135, %v105, 0
    %160 = vmatprep.subr.mxu0 %v107
    %161 = vmatpush1.msra.mxu0 %v106
    %162 = vmatprep.subr.mxu0 %v110
    %163 = vmatpush1.msra.mxu0 %v109
    %164 = vmatprep.subr.mxu0 %v113
    %165 = vmatpush1.msra.mxu0 %v112
    %166 = vmatprep.subr.mxu0 %v116
    %167 = vmatpush1.msra.mxu0 %v115
    %168 = vmatprep.subr.mxu0 0.0
    %169 = vmatpush1.msra.mxu0 0.0
    %170 = vmatprep.subr.mxu0 0.0
    %171 = vmatpush1.msra.mxu0 0.0
    %172 = vmatprep.subr.mxu0 0.0
    %173 = vmatpush1.msra.mxu0 0.0
    %174 = vmatprep.subr.mxu0 0.0
    %175 = vmatpush1.msra.mxu0 0.0
    %176 = vmatprep.subr.mxu0 0.0
    %177 = vmatpush1.msra.mxu0 0.0
    %178 = vmatprep.subr.mxu0 0.0
    %179 = vmatpush1.msra.mxu0 0.0
    %180 = vmatprep.subr.mxu0 0.0
    %181 = vmatpush1.msra.mxu0 0.0
    %182 = vmatprep.subr.mxu0 0.0
    %183 = vmatpush1.msra.mxu0 0.0
    %184 = vmatprep.subr.mxu0 0.0
    %185 = vmatpush1.msra.mxu0 0.0
    %186 = vmatprep.subr.mxu0 0.0
    %187 = vmatpush1.msra.mxu0 0.0
    %188 = vmatprep.subr.mxu0 0.0
    %189 = vmatpush1.msra.mxu0 0.0
    %190 = vmatprep.subr.mxu0 0.0
    %191 = vmatpush1.msra.mxu0 0.0
    %192 = vmatprep.subr.mxu0 0.0
    %193 = vmatpush1.msra.mxu0 0.0
    %194 = vmatprep.subr.mxu0 0.0
    %195 = vmatpush1.msra.mxu0 0.0
    %196 = vmatprep.subr.mxu0 0.0
    %197 = vmatpush1.msra.mxu0 0.0
    %198 = vmatprep.subr.mxu0 0.0
    %199 = vmatpush1.msra.mxu0 0.0
    %200 = vmatprep.subr.mxu0 0.0
    %201 = vmatpush1.msra.mxu0 0.0
    %202 = vmatprep.subr.mxu0 0.0
    %203 = vmatpush1.msra.mxu0 0.0
    %204 = vmatprep.subr.mxu0 0.0
    %205 = vmatpush1.msra.mxu0 0.0
    %206 = vmatprep.subr.mxu0 0.0
    %207 = vmatpush1.msra.mxu0 0.0
    %208 = vmatprep.subr.mxu0 0.0
    %209 = vmatpush1.msra.mxu0 0.0
    %210 = vmatprep.subr.mxu0 0.0
    %211 = vmatpush1.msra.mxu0 0.0
    %212 = vmatprep.subr.mxu0 0.0
    %213 = vmatpush1.msra.mxu0 0.0
    %214 = vmatprep.subr.mxu0 0.0
    %215 = vmatpush1.msra.mxu0 0.0
    %216 = vmatprep.subr.mxu0 0.0
    %217 = vmatpush1.msra.mxu0 0.0
    %218 = vmatprep.subr.mxu0 0.0
    %219 = vmatpush1.msra.mxu0 0.0
    %220 = vmatprep.subr.mxu0 0.0
    %221 = vmatpush1.msra.mxu0 0.0
    %222 = vmatprep.subr.mxu0 0.0
    %223 = vmatpush1.msra.mxu0 0.0
    %224 = vmatprep.mubr.f32.mxu0 0.0
    %225 = vmatmul.mubr.f32.gmra.mrb[0].mxu0 %v137
    %v226 = vpop.f32.mrb[0].mxu0
    %v227 = vadd.f32 %v123, %v226
    %v228 = vpop.f32.mrb[0].mxu0
    %v229 = vadd.f32 %v127, %v228
    %230 = vmatprep.mubr.f32.mxu0 0.0
    %231 = vmatmul.mubr.f32.gmra.mrb[0].mxu0 %v140
    %v232 = vpop.f32.mrb[0].mxu0
    %v233 = vadd.f32 %v123, %v232
    %v234 = vpop.f32.mrb[0].mxu0
    %v235 = vadd.f32 %v127, %v234
    %236 = vmatprep.mubr.f32.mxu0 0.0
    %237 = vmatmul.mubr.f32.gmra.mrb[0].mxu0 %v143
    %v238 = vpop.f32.mrb[0].mxu0
    %v239 = vadd.f32 %v123, %v238
    %v240 = vpop.f32.mrb[0].mxu0
    %v241 = vadd.f32 %v127, %v240
    %242 = vmatprep.mubr.f32.mxu0 0.0
    %243 = vmatmul.mubr.f32.gmra.mrb[0].mxu0 %v146
    %v244 = vpop.f32.mrb[0].mxu0
    %v245 = vadd.f32 %v123, %v244
    %v246 = vpop.f32.mrb[0].mxu0
    %v247 = vadd.f32 %v127, %v246
    %248 = vmatprep.mubr.f32.mxu0 0.0
    %249 = vmatmul.mubr.f32.gmra.mrb[0].mxu0 %v149
    %v250 = vpop.f32.mrb[0].mxu0
    %v251 = vadd.f32 %v123, %v250
    %v252 = vpop.f32.mrb[0].mxu0
    %v253 = vadd.f32 %v127, %v252
    %254 = vmatprep.mubr.f32.mxu0 0.0
    %255 = vmatmul.mubr.f32.gmra.mrb[0].mxu0 %v152
    %v256 = vpop.f32.mrb[0].mxu0
    %v257 = vadd.f32 %v123, %v256
    %v258 = vpop.f32.mrb[0].mxu0
    %v259 = vadd.f32 %v127, %v258
    %260 = vmatprep.mubr.f32.mxu0 0.0
    %261 = vmatmul.mubr.f32.gmra.mrb[0].mxu0 %v155
    %v262 = vpop.f32.mrb[0].mxu0
    %v263 = vadd.f32 %v123, %v262
    %v264 = vpop.f32.mrb[0].mxu0
    %v265 = vadd.f32 %v127, %v264
    %266 = vmatprep.mubr.f32.mxu0 0.0
    %267 = vmatmul.mubr.f32.gmra.mrb[0].mxu0 %v158
    %v268 = vpop.f32.mrb[0].mxu0
    %v269 = vadd.f32 %v123, %v268
    %v270 = vpop.f32.mrb[0].mxu0
    %v271 = vadd.f32 %v127, %v270
    %272 = vdwg.mxu0
    %273 = vmatprep.subr.mxu0 0.0
    %274 = vmatpush1.msra.mxu0 %v108
    %275 = vmatprep.subr.mxu0 0.0
    %276 = vmatpush1.msra.mxu0 %v111
    %277 = vmatprep.subr.mxu0 0.0
    %278 = vmatpush1.msra.mxu0 %v114
    %279 = vmatprep.subr.mxu0 0.0
    %280 = vmatpush1.msra.mxu0 %v117
    %281 = vmatprep.subr.mxu0 0.0
    %282 = vmatpush1.msra.mxu0 0.0
    %283 = vmatprep.subr.mxu0 0.0
    %284 = vmatpush1.msra.mxu0 0.0
    %285 = vmatprep.subr.mxu0 0.0
    %286 = vmatpush1.msra.mxu0 0.0
    %287 = vmatprep.subr.mxu0 0.0
    %288 = vmatpush1.msra.mxu0 0.0
    %289 = vmatprep.subr.mxu0 0.0
    %290 = vmatpush1.msra.mxu0 0.0
    %291 = vmatprep.subr.mxu0 0.0
    %292 = vmatpush1.msra.mxu0 0.0
    %293 = vmatprep.subr.mxu0 0.0
    %294 = vmatpush1.msra.mxu0 0.0
    %295 = vmatprep.subr.mxu0 0.0
    %296 = vmatpush1.msra.mxu0 0.0
    %297 = vmatprep.subr.mxu0 0.0
    %298 = vmatpush1.msra.mxu0 0.0
    %299 = vmatprep.subr.mxu0 0.0
    %300 = vmatpush1.msra.mxu0 0.0
    %301 = vmatprep.subr.mxu0 0.0
    %302 = vmatpush1.msra.mxu0 0.0
    %303 = vmatprep.subr.mxu0 0.0
    %304 = vmatpush1.msra.mxu0 0.0
    %305 = vmatprep.subr.mxu0 0.0
    %306 = vmatpush1.msra.mxu0 0.0
    %307 = vmatprep.subr.mxu0 0.0
    %308 = vmatpush1.msra.mxu0 0.0
    %309 = vmatprep.subr.mxu0 0.0
    %310 = vmatpush1.msra.mxu0 0.0
    %311 = vmatprep.subr.mxu0 0.0
    %312 = vmatpush1.msra.mxu0 0.0
    %313 = vmatprep.subr.mxu0 0.0
    %314 = vmatpush1.msra.mxu0 0.0
    %315 = vmatprep.subr.mxu0 0.0
    %316 = vmatpush1.msra.mxu0 0.0
    %317 = vmatprep.subr.mxu0 0.0
    %318 = vmatpush1.msra.mxu0 0.0
    %319 = vmatprep.subr.mxu0 0.0
    %320 = vmatpush1.msra.mxu0 0.0
    %321 = vmatprep.subr.mxu0 0.0
    %322 = vmatpush1.msra.mxu0 0.0
    %323 = vmatprep.subr.mxu0 0.0
    %324 = vmatpush1.msra.mxu0 0.0
    %325 = vmatprep.subr.mxu0 0.0
    %326 = vmatpush1.msra.mxu0 0.0
    %327 = vmatprep.subr.mxu0 0.0
    %328 = vmatpush1.msra.mxu0 0.0
    %329 = vmatprep.subr.mxu0 0.0
    %330 = vmatpush1.msra.mxu0 0.0
    %331 = vmatprep.subr.mxu0 0.0
    %332 = vmatpush1.msra.mxu0 0.0
    %333 = vmatprep.subr.mxu0 0.0
    %334 = vmatpush1.msra.mxu0 0.0
    %335 = vmatprep.subr.mxu0 0.0
    %336 = vmatpush1.msra.mxu0 0.0
    %337 = vmatprep.mubr.f32.mxu0 0.0
    %338 = vmatmul.mubr.f32.gmra.mrb[0].mxu0 %v137
    %v339 = vpop.f32.mrb[0].mxu0
    %v340 = vadd.f32 %v131, %v339
    %v341 = vpop.f32.mrb[0].mxu0
    %342 = vmatprep.mubr.f32.mxu0 0.0
    %343 = vmatmul.mubr.f32.gmra.mrb[0].mxu0 %v140
    %v344 = vpop.f32.mrb[0].mxu0
    %v345 = vadd.f32 %v131, %v344
    %v346 = vpop.f32.mrb[0].mxu0
    %347 = vmatprep.mubr.f32.mxu0 0.0
    %348 = vmatmul.mubr.f32.gmra.mrb[0].mxu0 %v143
    %v349 = vpop.f32.mrb[0].mxu0
    %v350 = vadd.f32 %v131, %v349
    %v351 = vpop.f32.mrb[0].mxu0
    %352 = vmatprep.mubr.f32.mxu0 0.0
    %353 = vmatmul.mubr.f32.gmra.mrb[0].mxu0 %v146
    %v354 = vpop.f32.mrb[0].mxu0
    %v355 = vadd.f32 %v131, %v354
    %v356 = vpop.f32.mrb[0].mxu0
    %357 = vmatprep.mubr.f32.mxu0 0.0
    %358 = vmatmul.mubr.f32.gmra.mrb[0].mxu0 %v149
    %v359 = vpop.f32.mrb[0].mxu0
    %v360 = vadd.f32 %v131, %v359
    %v361 = vpop.f32.mrb[0].mxu0
    %362 = vmatprep.mubr.f32.mxu0 0.0
    %363 = vmatmul.mubr.f32.gmra.mrb[0].mxu0 %v152
    %v364 = vpop.f32.mrb[0].mxu0
    %v365 = vadd.f32 %v131, %v364
    %v366 = vpop.f32.mrb[0].mxu0
    %367 = vmatprep.mubr.f32.mxu0 0.0
    %368 = vmatmul.mubr.f32.gmra.mrb[0].mxu0 %v155
    %v369 = vpop.f32.mrb[0].mxu0
    %v370 = vadd.f32 %v131, %v369
    %v371 = vpop.f32.mrb[0].mxu0
    %372 = vmatprep.mubr.f32.mxu0 0.0
    %373 = vmatmul.mubr.f32.gmra.mrb[0].mxu0 %v158
    %v374 = vpop.f32.mrb[0].mxu0
    %v375 = vadd.f32 %v131, %v374
    %v376 = vpop.f32.mrb[0].mxu0
    %377 = vdwg.mxu0
    %378 = vst [vmem:[#allocation2] sm:$0xff] %v227
    %379 = vst [vmem:[#allocation2 + $0x8] sm:$0xff] %v229
    %380 = vst [vmem:[#allocation2 + $0x10] sm:$0xff] %v340
    %381 = vst [vmem:[#allocation2 + $0x18] sm:$0xff] %v233
    %382 = vst [vmem:[#allocation2 + $0x20] sm:$0xff] %v235
    %383 = vst [vmem:[#allocation2 + $0x28] sm:$0xff] %v345
    %384 = vst [vmem:[#allocation2 + $0x30] sm:$0xff] %v239
    %385 = vst [vmem:[#allocation2 + $0x38] sm:$0xff] %v241
    %386 = vst [vmem:[#allocation2 + $0x40] sm:$0xff] %v350
    %387 = vst [vmem:[#allocation2 + $0x48] sm:$0xff] %v245
    %388 = vst [vmem:[#allocation2 + $0x50] sm:$0xff] %v247
    %389 = vst [vmem:[#allocation2 + $0x58] sm:$0xff] %v355
    %390 = vst [vmem:[#allocation2 + $0x60] sm:$0xff] %v251
    %391 = vst [vmem:[#allocation2 + $0x68] sm:$0xff] %v253
    %392 = vst [vmem:[#allocation2 + $0x70] sm:$0xff] %v360
    %393 = vst [vmem:[#allocation2 + $0x78] sm:$0xff] %v257
    %394 = vst [vmem:[#allocation2 + $0x80] sm:$0xff] %v259
    %395 = vst [vmem:[#allocation2 + $0x88] sm:$0xff] %v365
    %396 = vst [vmem:[#allocation2 + $0x90] sm:$0xff] %v263
    %397 = vst [vmem:[#allocation2 + $0x98] sm:$0xff] %v265
    %398 = vst [vmem:[#allocation2 + $0xa0] sm:$0xff] %v370
    %399 = vst [vmem:[#allocation2 + $0xa8] sm:$0xff] %v269
    %400 = vst [vmem:[#allocation2 + $0xb0] sm:$0xff] %v271
    %401 = vst [vmem:[#allocation2 + $0xb8] sm:$0xff] %v375
    %v402 = vld [vmem:[#allocation9] sm:$0xff]
    %v403 = vld [vmem:[#allocation9 + $0x8] sm:$0xff]
    %v404 = vld [vmem:[#allocation9 + $0x10] sm:$0xff]
    %v405 = vld [vmem:[#allocation9 + $0x18] sm:$0xff]
    %v406 = vld [vmem:[#allocation9 + $0x20] sm:$0xff]
    %v407 = vld [vmem:[#allocation9 + $0x28] sm:$0xff]
    %v408 = vld [vmem:[#allocation9 + $0x30] sm:$0xff]
    %v409 = vld [vmem:[#allocation9 + $0x38] sm:$0xff]
    %v410 = vld [vmem:[#allocation9 + $0x40] sm:$0xff]
    %v411 = vld [vmem:[#allocation9 + $0x48] sm:$0xff]
    %v412 = vld [vmem:[#allocation9 + $0x50] sm:$0xff]
    %v413 = vld [vmem:[#allocation9 + $0x58] sm:$0xff]
    %v414 = vld [vmem:[#allocation9 + $0x60] sm:$0xff]
    %v415 = vld [vmem:[#allocation9 + $0x68] sm:$0xff]
    %v416 = vld [vmem:[#allocation9 + $0x70] sm:$0xff]
    %v417 = vld [vmem:[#allocation9 + $0x78] sm:$0xff]
    %v418 = vld [vmem:[#allocation9 + $0x80] sm:$0xff]
    %v419 = vld [vmem:[#allocation9 + $0x88] sm:$0xff]
    %v420 = vld [vmem:[#allocation9 + $0x90] sm:$0xff]
    %v421 = vld [vmem:[#allocation9 + $0x98] sm:$0xff]
    %v422 = vld [vmem:[#allocation9 + $0xa0] sm:$0xff]
    %v423 = vld [vmem:[#allocation9 + $0xa8] sm:$0xff]
    %v424 = vld [vmem:[#allocation9 + $0xb0] sm:$0xff]
    %v425 = vld [vmem:[#allocation9 + $0xb8] sm:$0xff]
    %v426 = vld [vmem:[#allocation9 + $0xc0] sm:$0xff]
    %v427 = vld [vmem:[#allocation9 + $0xc8] sm:$0xff]
    %v428 = vld [vmem:[#allocation9 + $0xd0] sm:$0xff]
    %v429 = vld [vmem:[#allocation9 + $0xd8] sm:$0xff]
    %v430 = vld [vmem:[#allocation9 + $0xe0] sm:$0xff]
    %v431 = vld [vmem:[#allocation9 + $0xe8] sm:$0xff]
    %v432 = vld [vmem:[#allocation9 + $0xf0] sm:$0xff]
    %v433 = vld [vmem:[#allocation9 + $0xf8] sm:$0xff]
    %v434 = vld [vmem:[#allocation9 + $0x100] sm:$0xff]
    %v435 = vld [vmem:[#allocation9 + $0x108] sm:$0xff]
    %v436 = vld [vmem:[#allocation9 + $0x110] sm:$0xff]
    %v437 = vld [vmem:[#allocation9 + $0x118] sm:$0xff]
    %v438 = vld [vmem:[#allocation9 + $0x120] sm:$0xff]
    %v439 = vld [vmem:[#allocation9 + $0x128] sm:$0xff]
    %v440 = vld [vmem:[#allocation9 + $0x130] sm:$0xff]
    %v441 = vld [vmem:[#allocation9 + $0x138] sm:$0xff]
    %v442 = vld [vmem:[#allocation9 + $0x140] sm:$0xff]
    %v443 = vld [vmem:[#allocation9 + $0x148] sm:$0xff]
    %v444 = vld [vmem:[#allocation9 + $0x150] sm:$0xff]
    %v445 = vld [vmem:[#allocation9 + $0x158] sm:$0xff]
    %v446 = vld [vmem:[#allocation9 + $0x160] sm:$0xff]
    %v447 = vld [vmem:[#allocation9 + $0x168] sm:$0xff]
    %v448 = vld [vmem:[#allocation9 + $0x170] sm:$0xff]
    %v449 = vld [vmem:[#allocation9 + $0x178] sm:$0xff]
    %v450 = vld [vmem:[%s5] sm:$0x1]
    %v452 = vlaneseq
    %v453 = vshrl.u32 %v452, 7
    %v454 = vsub.s32 0, %v453
    %v455 = vrot.slane %v450, %v454
    %v457 = vld [vmem:[#allocation2] sm:$0xff]
    %v458 = vld [vmem:[#allocation2 + $0x8] sm:$0xff]
    %v459 = vld [vmem:[#allocation2 + $0x10] sm:$0xff]
    %460 = vmatprep.subr.mxu0 %v403
    %461 = vmatpush1.msra.mxu0 %v402
    %462 = vmatprep.subr.mxu0 %v406
    %463 = vmatpush1.msra.mxu0 %v405
    %464 = vmatprep.subr.mxu0 %v409
    %465 = vmatpush1.msra.mxu0 %v408
    %466 = vmatprep.subr.mxu0 %v412
    %467 = vmatpush1.msra.mxu0 %v411
    %468 = vmatprep.subr.mxu0 %v415
    %469 = vmatpush1.msra.mxu0 %v414
    %470 = vmatprep.subr.mxu0 %v418
    %471 = vmatpush1.msra.mxu0 %v417
    %472 = vmatprep.subr.mxu0 %v421
    %473 = vmatpush1.msra.mxu0 %v420
    %474 = vmatprep.subr.mxu0 %v424
    %475 = vmatpush1.msra.mxu0 %v423
    %476 = vmatprep.subr.mxu0 %v427
    %477 = vmatpush1.msra.mxu0 %v426
    %478 = vmatprep.subr.mxu0 %v430
    %479 = vmatpush1.msra.mxu0 %v429
    %480 = vmatprep.subr.mxu0 %v433
    %481 = vmatpush1.msra.mxu0 %v432
    %482 = vmatprep.subr.mxu0 %v436
    %483 = vmatpush1.msra.mxu0 %v435
    %484 = vmatprep.subr.mxu0 %v439
    %485 = vmatpush1.msra.mxu0 %v438
    %486 = vmatprep.subr.mxu0 %v442
    %487 = vmatpush1.msra.mxu0 %v441
    %488 = vmatprep.subr.mxu0 %v445
    %489 = vmatpush1.msra.mxu0 %v444
    %490 = vmatprep.subr.mxu0 %v448
    %491 = vmatpush1.msra.mxu0 %v447
    %492 = vmatprep.subr.mxu0 0.0
    %493 = vmatpush1.msra.mxu0 0.0
    %494 = vmatprep.subr.mxu0 0.0
    %495 = vmatpush1.msra.mxu0 0.0
    %496 = vmatprep.subr.mxu0 0.0
    %497 = vmatpush1.msra.mxu0 0.0
    %498 = vmatprep.subr.mxu0 0.0
    %499 = vmatpush1.msra.mxu0 0.0
    %500 = vmatprep.subr.mxu0 0.0
    %501 = vmatpush1.msra.mxu0 0.0
    %502 = vmatprep.subr.mxu0 0.0
    %503 = vmatpush1.msra.mxu0 0.0
    %504 = vmatprep.subr.mxu0 0.0
    %505 = vmatpush1.msra.mxu0 0.0
    %506 = vmatprep.subr.mxu0 0.0
    %507 = vmatpush1.msra.mxu0 0.0
    %508 = vmatprep.subr.mxu0 0.0
    %509 = vmatpush1.msra.mxu0 0.0
    %510 = vmatprep.subr.mxu0 0.0
    %511 = vmatpush1.msra.mxu0 0.0
    %512 = vmatprep.subr.mxu0 0.0
    %513 = vmatpush1.msra.mxu0 0.0
    %514 = vmatprep.subr.mxu0 0.0
    %515 = vmatpush1.msra.mxu0 0.0
    %516 = vmatprep.subr.mxu0 0.0
    %517 = vmatpush1.msra.mxu0 0.0
    %518 = vmatprep.subr.mxu0 0.0
    %519 = vmatpush1.msra.mxu0 0.0
    %520 = vmatprep.subr.mxu0 0.0
    %521 = vmatpush1.msra.mxu0 0.0
    %522 = vmatprep.subr.mxu0 0.0
    %523 = vmatpush1.msra.mxu0 0.0
    %524 = vmatprep.mubr.f32.mxu0 0.0
    %525 = vmatmul.mubr.f32.gmra.mrb[0].mxu0 0.0
    %v526 = vpop.f32.mrb[0].mxu0
    %v527 = vadd.f32 0.0, %v526
    %v528 = vpop.f32.mrb[0].mxu0
    %v529 = vadd.f32 0.0, %v528
    %530 = vdwg.mxu0
    %531 = vmatprep.subr.mxu0 0.0
    %532 = vmatpush1.msra.mxu0 %v404
    %533 = vmatprep.subr.mxu0 0.0
    %534 = vmatpush1.msra.mxu0 %v407
    %535 = vmatprep.subr.mxu0 0.0
    %536 = vmatpush1.msra.mxu0 %v410
    %537 = vmatprep.subr.mxu0 0.0
    %538 = vmatpush1.msra.mxu0 %v413
    %539 = vmatprep.subr.mxu0 0.0
    %540 = vmatpush1.msra.mxu0 %v416
    %541 = vmatprep.subr.mxu0 0.0
    %542 = vmatpush1.msra.mxu0 %v419
    %543 = vmatprep.subr.mxu0 0.0
    %544 = vmatpush1.msra.mxu0 %v422
    %545 = vmatprep.subr.mxu0 0.0
    %546 = vmatpush1.msra.mxu0 %v425
    %547 = vmatprep.subr.mxu0 0.0
    %548 = vmatpush1.msra.mxu0 %v428
    %549 = vmatprep.subr.mxu0 0.0
    %550 = vmatpush1.msra.mxu0 %v431
    %551 = vmatprep.subr.mxu0 0.0
    %552 = vmatpush1.msra.mxu0 %v434
    %553 = vmatprep.subr.mxu0 0.0
    %554 = vmatpush1.msra.mxu0 %v437
    %555 = vmatprep.subr.mxu0 0.0
    %556 = vmatpush1.msra.mxu0 %v440
    %557 = vmatprep.subr.mxu0 0.0
    %558 = vmatpush1.msra.mxu0 %v443
    %559 = vmatprep.subr.mxu0 0.0
    %560 = vmatpush1.msra.mxu0 %v446
    %561 = vmatprep.subr.mxu0 0.0
    %562 = vmatpush1.msra.mxu0 %v449
    %563 = vmatprep.subr.mxu0 0.0
    %564 = vmatpush1.msra.mxu0 0.0
    %565 = vmatprep.subr.mxu0 0.0
    %566 = vmatpush1.msra.mxu0 0.0
    %567 = vmatprep.subr.mxu0 0.0
    %568 = vmatpush1.msra.mxu0 0.0
    %569 = vmatprep.subr.mxu0 0.0
    %570 = vmatpush1.msra.mxu0 0.0
    %571 = vmatprep.subr.mxu0 0.0
    %572 = vmatpush1.msra.mxu0 0.0
    %573 = vmatprep.subr.mxu0 0.0
    %574 = vmatpush1.msra.mxu0 0.0
    %575 = vmatprep.subr.mxu0 0.0
    %576 = vmatpush1.msra.mxu0 0.0
    %577 = vmatprep.subr.mxu0 0.0
    %578 = vmatpush1.msra.mxu0 0.0
    %579 = vmatprep.subr.mxu0 0.0
    %580 = vmatpush1.msra.mxu0 0.0
    %581 = vmatprep.subr.mxu0 0.0
    %582 = vmatpush1.msra.mxu0 0.0
    %583 = vmatprep.subr.mxu0 0.0
    %584 = vmatpush1.msra.mxu0 0.0
    %585 = vmatprep.subr.mxu0 0.0
    %586 = vmatpush1.msra.mxu0 0.0
    %587 = vmatprep.subr.mxu0 0.0
    %588 = vmatpush1.msra.mxu0 0.0
    %589 = vmatprep.subr.mxu0 0.0
    %590 = vmatpush1.msra.mxu0 0.0
    %591 = vmatprep.subr.mxu0 0.0
    %592 = vmatpush1.msra.mxu0 0.0
    %593 = vmatprep.subr.mxu0 0.0
    %594 = vmatpush1.msra.mxu0 0.0
    %595 = vmatprep.mubr.f32.mxu0 0.0
    %596 = vmatmul.mubr.f32.gmra.mrb[0].mxu0 0.0
    %v597 = vpop.f32.mrb[0].mxu0
    %v598 = vadd.f32 0.0, %v597
    %v599 = vpop.f32.mrb[0].mxu0
    %600 = vdwg.mxu0
    %v601 = vadd.f32 %v457, %v527
    %v602 = vadd.f32 %v458, %v529
    %v603 = vxor.u32 %v601, 2147483648
    %v604 = vxor.u32 %v602, 2147483648
    %v605 = vmul.f32 %v603, 1.442695
    %v606 = vpow.pop %v605
    %v607 = vmul.f32 %v604, 1.442695
    %v608 = vpow.pop %v607
    %v609 = vadd.f32 %v606, 1.0
    %v610 = vadd.f32 %v608, 1.0
    %v611 = vrcp.pop %v609
    %v612 = vmul.f32 1.0, %v611
    %v613 = vrcp.pop %v610
    %v614 = vmul.f32 1.0, %v613
    %v615 = vadd.f32 %v598, %v455
    %v616 = vmul.f32 %v612, %v615
    %v617 = vadd.f32 %v459, %v616
    %v618 = vtanh.pop %v617
    %v619 = vsub.f32 0.0, %v618
    %v620 = vmul.f32 %v614, %v619
    %v621 = vadd.f32 %v618, %v620
    %622 = vst [vmem:[#allocation11] sm:$0xff] %v621
    %s623 = scalar_lea.vmem [#allocation2], 24
    %v624 = vld [vmem:[%s623] sm:$0xff]
    %v625 = vld [vmem:[%s623 + $0x8] sm:$0xff]
    %v626 = vld [vmem:[%s623 + $0x10] sm:$0xff]
    %627 = vmatprep.subr.mxu0 %v403
    %628 = vmatpush1.msra.mxu0 %v402
    %629 = vmatprep.subr.mxu0 %v406
    %630 = vmatpush1.msra.mxu0 %v405
    %631 = vmatprep.subr.mxu0 %v409
    %632 = vmatpush1.msra.mxu0 %v408
    %633 = vmatprep.subr.mxu0 %v412
    %634 = vmatpush1.msra.mxu0 %v411
    %635 = vmatprep.subr.mxu0 %v415
    %636 = vmatpush1.msra.mxu0 %v414
    %637 = vmatprep.subr.mxu0 %v418
    %638 = vmatpush1.msra.mxu0 %v417
    %639 = vmatprep.subr.mxu0 %v421
    %640 = vmatpush1.msra.mxu0 %v420
    %641 = vmatprep.subr.mxu0 %v424
    %642 = vmatpush1.msra.mxu0 %v423
    %643 = vmatprep.subr.mxu0 %v427
    %644 = vmatpush1.msra.mxu0 %v426
    %645 = vmatprep.subr.mxu0 %v430
    %646 = vmatpush1.msra.mxu0 %v429
    %647 = vmatprep.subr.mxu0 %v433
    %648 = vmatpush1.msra.mxu0 %v432
    %649 = vmatprep.subr.mxu0 %v436
    %650 = vmatpush1.msra.mxu0 %v435
    %651 = vmatprep.subr.mxu0 %v439
    %652 = vmatpush1.msra.mxu0 %v438
    %653 = vmatprep.subr.mxu0 %v442
    %654 = vmatpush1.msra.mxu0 %v441
    %655 = vmatprep.subr.mxu0 %v445
    %656 = vmatpush1.msra.mxu0 %v444
    %657 = vmatprep.subr.mxu0 %v448
    %658 = vmatpush1.msra.mxu0 %v447
    %659 = vmatprep.subr.mxu0 0.0
    %660 = vmatpush1.msra.mxu0 0.0
    %661 = vmatprep.subr.mxu0 0.0
    %662 = vmatpush1.msra.mxu0 0.0
    %663 = vmatprep.subr.mxu0 0.0
    %664 = vmatpush1.msra.mxu0 0.0
    %665 = vmatprep.subr.mxu0 0.0
    %666 = vmatpush1.msra.mxu0 0.0
    %667 = vmatprep.subr.mxu0 0.0
    %668 = vmatpush1.msra.mxu0 0.0
    %669 = vmatprep.subr.mxu0 0.0
    %670 = vmatpush1.msra.mxu0 0.0
    %671 = vmatprep.subr.mxu0 0.0
    %672 = vmatpush1.msra.mxu0 0.0
    %673 = vmatprep.subr.mxu0 0.0
    %674 = vmatpush1.msra.mxu0 0.0
    %675 = vmatprep.subr.mxu0 0.0
    %676 = vmatpush1.msra.mxu0 0.0
    %677 = vmatprep.subr.mxu0 0.0
    %678 = vmatpush1.msra.mxu0 0.0
    %679 = vmatprep.subr.mxu0 0.0
    %680 = vmatpush1.msra.mxu0 0.0
    %681 = vmatprep.subr.mxu0 0.0
    %682 = vmatpush1.msra.mxu0 0.0
    %683 = vmatprep.subr.mxu0 0.0
    %684 = vmatpush1.msra.mxu0 0.0
    %685 = vmatprep.subr.mxu0 0.0
    %686 = vmatpush1.msra.mxu0 0.0
    %687 = vmatprep.subr.mxu0 0.0
    %688 = vmatpush1.msra.mxu0 0.0
    %689 = vmatprep.subr.mxu0 0.0
    %690 = vmatpush1.msra.mxu0 0.0
    %691 = vmatprep.mubr.f32.mxu0 0.0
    %692 = vmatmul.mubr.f32.gmra.mrb[0].mxu0 %v621
    %v693 = vpop.f32.mrb[0].mxu0
    %v694 = vadd.f32 0.0, %v693
    %v695 = vpop.f32.mrb[0].mxu0
    %v696 = vadd.f32 0.0, %v695
    %697 = vdwg.mxu0
    %698 = vmatprep.subr.mxu0 0.0
    %699 = vmatpush1.msra.mxu0 %v404
    %700 = vmatprep.subr.mxu0 0.0
    %701 = vmatpush1.msra.mxu0 %v407
    %702 = vmatprep.subr.mxu0 0.0
    %703 = vmatpush1.msra.mxu0 %v410
    %704 = vmatprep.subr.mxu0 0.0
    %705 = vmatpush1.msra.mxu0 %v413
    %706 = vmatprep.subr.mxu0 0.0
    %707 = vmatpush1.msra.mxu0 %v416
    %708 = vmatprep.subr.mxu0 0.0
    %709 = vmatpush1.msra.mxu0 %v419
    %710 = vmatprep.subr.mxu0 0.0
    %711 = vmatpush1.msra.mxu0 %v422
    %712 = vmatprep.subr.mxu0 0.0
    %713 = vmatpush1.msra.mxu0 %v425
    %714 = vmatprep.subr.mxu0 0.0
    %715 = vmatpush1.msra.mxu0 %v428
    %716 = vmatprep.subr.mxu0 0.0
    %717 = vmatpush1.msra.mxu0 %v431
    %718 = vmatprep.subr.mxu0 0.0
    %719 = vmatpush1.msra.mxu0 %v434
    %720 = vmatprep.subr.mxu0 0.0
    %721 = vmatpush1.msra.mxu0 %v437
    %722 = vmatprep.subr.mxu0 0.0
    %723 = vmatpush1.msra.mxu0 %v440
    %724 = vmatprep.subr.mxu0 0.0
    %725 = vmatpush1.msra.mxu0 %v443
    %726 = vmatprep.subr.mxu0 0.0
    %727 = vmatpush1.msra.mxu0 %v446
    %728 = vmatprep.subr.mxu0 0.0
    %729 = vmatpush1.msra.mxu0 %v449
    %730 = vmatprep.subr.mxu0 0.0
    %731 = vmatpush1.msra.mxu0 0.0
    %732 = vmatprep.subr.mxu0 0.0
    %733 = vmatpush1.msra.mxu0 0.0
    %734 = vmatprep.subr.mxu0 0.0
    %735 = vmatpush1.msra.mxu0 0.0
    %736 = vmatprep.subr.mxu0 0.0
    %737 = vmatpush1.msra.mxu0 0.0
    %738 = vmatprep.subr.mxu0 0.0
    %739 = vmatpush1.msra.mxu0 0.0
    %740 = vmatprep.subr.mxu0 0.0
    %741 = vmatpush1.msra.mxu0 0.0
    %742 = vmatprep.subr.mxu0 0.0
    %743 = vmatpush1.msra.mxu0 0.0
    %744 = vmatprep.subr.mxu0 0.0
    %745 = vmatpush1.msra.mxu0 0.0
    %746 = vmatprep.subr.mxu0 0.0
    %747 = vmatpush1.msra.mxu0 0.0
    %748 = vmatprep.subr.mxu0 0.0
    %749 = vmatpush1.msra.mxu0 0.0
    %750 = vmatprep.subr.mxu0 0.0
    %751 = vmatpush1.msra.mxu0 0.0
    %752 = vmatprep.subr.mxu0 0.0
    %753 = vmatpush1.msra.mxu0 0.0
    %754 = vmatprep.subr.mxu0 0.0
    %755 = vmatpush1.msra.mxu0 0.0
    %756 = vmatprep.subr.mxu0 0.0
    %757 = vmatpush1.msra.mxu0 0.0
    %758 = vmatprep.subr.mxu0 0.0
    %759 = vmatpush1.msra.mxu0 0.0
    %760 = vmatprep.subr.mxu0 0.0
    %761 = vmatpush1.msra.mxu0 0.0
    %762 = vmatprep.mubr.f32.mxu0 0.0
    %763 = vmatmul.mubr.f32.gmra.mrb[0].mxu0 %v621
    %v764 = vpop.f32.mrb[0].mxu0
    %v765 = vadd.f32 0.0, %v764
    %v766 = vpop.f32.mrb[0].mxu0
    %767 = vdwg.mxu0
    %v768 = vadd.f32 %v624, %v694
    %v769 = vadd.f32 %v625, %v696
    %v770 = vxor.u32 %v768, 2147483648
    %v771 = vxor.u32 %v769, 2147483648
    %v772 = vmul.f32 %v770, 1.442695
    %v773 = vpow.pop %v772
    %v774 = vmul.f32 %v771, 1.442695
    %v775 = vpow.pop %v774
    %v776 = vadd.f32 %v773, 1.0
    %v777 = vadd.f32 %v775, 1.0
    %v778 = vrcp.pop %v776
    %v779 = vmul.f32 1.0, %v778
    %v780 = vrcp.pop %v777
    %v781 = vmul.f32 1.0, %v780
    %v782 = vadd.f32 %v765, %v455
    %v783 = vmul.f32 %v779, %v782
    %v784 = vadd.f32 %v626, %v783
    %v785 = vtanh.pop %v784
    %v786 = vsub.f32 %v621, %v785
    %v787 = vmul.f32 %v781, %v786
    %v788 = vadd.f32 %v785, %v787
    %s789 = scalar_lea.vmem [#allocation11], 8
    %790 = vst [vmem:[%s789] sm:$0xff] %v788
    %s791 = scalar_lea.vmem [#allocation2], 48
    %v792 = vld [vmem:[%s791] sm:$0xff]
    %v793 = vld [vmem:[%s791 + $0x8] sm:$0xff]
    %v794 = vld [vmem:[%s791 + $0x10] sm:$0xff]
    %795 = vmatprep.subr.mxu0 %v403
    %796 = vmatpush1.msra.mxu0 %v402
    %797 = vmatprep.subr.mxu0 %v406
    %798 = vmatpush1.msra.mxu0 %v405
    %799 = vmatprep.subr.mxu0 %v409
    %800 = vmatpush1.msra.mxu0 %v408
    %801 = vmatprep.subr.mxu0 %v412
    %802 = vmatpush1.msra.mxu0 %v411
    %803 = vmatprep.subr.mxu0 %v415
    %804 = vmatpush1.msra.mxu0 %v414
    %805 = vmatprep.subr.mxu0 %v418
    %806 = vmatpush1.msra.mxu0 %v417
    %807 = vmatprep.subr.mxu0 %v421
    %808 = vmatpush1.msra.mxu0 %v420
    %809 = vmatprep.subr.mxu0 %v424
    %810 = vmatpush1.msra.mxu0 %v423
    %811 = vmatprep.subr.mxu0 %v427
    %812 = vmatpush1.msra.mxu0 %v426
    %813 = vmatprep.subr.mxu0 %v430
    %814 = vmatpush1.msra.mxu0 %v429
    %815 = vmatprep.subr.mxu0 %v433
    %816 = vmatpush1.msra.mxu0 %v432
    %817 = vmatprep.subr.mxu0 %v436
    %818 = vmatpush1.msra.mxu0 %v435
    %819 = vmatprep.subr.mxu0 %v439
    %820 = vmatpush1.msra.mxu0 %v438
    %821 = vmatprep.subr.mxu0 %v442
    %822 = vmatpush1.msra.mxu0 %v441
    %823 = vmatprep.subr.mxu0 %v445
    %824 = vmatpush1.msra.mxu0 %v444
    %825 = vmatprep.subr.mxu0 %v448
    %826 = vmatpush1.msra.mxu0 %v447
    %827 = vmatprep.subr.mxu0 0.0
    %828 = vmatpush1.msra.mxu0 0.0
    %829 = vmatprep.subr.mxu0 0.0
    %830 = vmatpush1.msra.mxu0 0.0
    %831 = vmatprep.subr.mxu0 0.0
    %832 = vmatpush1.msra.mxu0 0.0
    %833 = vmatprep.subr.mxu0 0.0
    %834 = vmatpush1.msra.mxu0 0.0
    %835 = vmatprep.subr.mxu0 0.0
    %836 = vmatpush1.msra.mxu0 0.0
    %837 = vmatprep.subr.mxu0 0.0
    %838 = vmatpush1.msra.mxu0 0.0
    %839 = vmatprep.subr.mxu0 0.0
    %840 = vmatpush1.msra.mxu0 0.0
    %841 = vmatprep.subr.mxu0 0.0
    %842 = vmatpush1.msra.mxu0 0.0
    %843 = vmatprep.subr.mxu0 0.0
    %844 = vmatpush1.msra.mxu0 0.0
    %845 = vmatprep.subr.mxu0 0.0
    %846 = vmatpush1.msra.mxu0 0.0
    %847 = vmatprep.subr.mxu0 0.0
    %848 = vmatpush1.msra.mxu0 0.0
    %849 = vmatprep.subr.mxu0 0.0
    %850 = vmatpush1.msra.mxu0 0.0
    %851 = vmatprep.subr.mxu0 0.0
    %852 = vmatpush1.msra.mxu0 0.0
    %853 = vmatprep.subr.mxu0 0.0
    %854 = vmatpush1.msra.mxu0 0.0
    %855 = vmatprep.subr.mxu0 0.0
    %856 = vmatpush1.msra.mxu0 0.0
    %857 = vmatprep.subr.mxu0 0.0
    %858 = vmatpush1.msra.mxu0 0.0
    %859 = vmatprep.mubr.f32.mxu0 0.0
    %860 = vmatmul.mubr.f32.gmra.mrb[0].mxu0 %v788
    %v861 = vpop.f32.mrb[0].mxu0
    %v862 = vadd.f32 0.0, %v861
    %v863 = vpop.f32.mrb[0].mxu0
    %v864 = vadd.f32 0.0, %v863
    %865 = vdwg.mxu0
    %866 = vmatprep.subr.mxu0 0.0
    %867 = vmatpush1.msra.mxu0 %v404
    %868 = vmatprep.subr.mxu0 0.0
    %869 = vmatpush1.msra.mxu0 %v407
    %870 = vmatprep.subr.mxu0 0.0
    %871 = vmatpush1.msra.mxu0 %v410
    %872 = vmatprep.subr.mxu0 0.0
    %873 = vmatpush1.msra.mxu0 %v413
    %874 = vmatprep.subr.mxu0 0.0
    %875 = vmatpush1.msra.mxu0 %v416
    %876 = vmatprep.subr.mxu0 0.0
    %877 = vmatpush1.msra.mxu0 %v419
    %878 = vmatprep.subr.mxu0 0.0
    %879 = vmatpush1.msra.mxu0 %v422
    %880 = vmatprep.subr.mxu0 0.0
    %881 = vmatpush1.msra.mxu0 %v425
    %882 = vmatprep.subr.mxu0 0.0
    %883 = vmatpush1.msra.mxu0 %v428
    %884 = vmatprep.subr.mxu0 0.0
    %885 = vmatpush1.msra.mxu0 %v431
    %886 = vmatprep.subr.mxu0 0.0
    %887 = vmatpush1.msra.mxu0 %v434
    %888 = vmatprep.subr.mxu0 0.0
    %889 = vmatpush1.msra.mxu0 %v437
    %890 = vmatprep.subr.mxu0 0.0
    %891 = vmatpush1.msra.mxu0 %v440
    %892 = vmatprep.subr.mxu0 0.0
    %893 = vmatpush1.msra.mxu0 %v443
    %894 = vmatprep.subr.mxu0 0.0
    %895 = vmatpush1.msra.mxu0 %v446
    %896 = vmatprep.subr.mxu0 0.0
    %897 = vmatpush1.msra.mxu0 %v449
    %898 = vmatprep.subr.mxu0 0.0
    %899 = vmatpush1.msra.mxu0 0.0
    %900 = vmatprep.subr.mxu0 0.0
    %901 = vmatpush1.msra.mxu0 0.0
    %902 = vmatprep.subr.mxu0 0.0
    %903 = vmatpush1.msra.mxu0 0.0
    %904 = vmatprep.subr.mxu0 0.0
    %905 = vmatpush1.msra.mxu0 0.0
    %906 = vmatprep.subr.mxu0 0.0
    %907 = vmatpush1.msra.mxu0 0.0
    %908 = vmatprep.subr.mxu0 0.0
    %909 = vmatpush1.msra.mxu0 0.0
    %910 = vmatprep.subr.mxu0 0.0
    %911 = vmatpush1.msra.mxu0 0.0
    %912 = vmatprep.subr.mxu0 0.0
    %913 = vmatpush1.msra.mxu0 0.0
    %914 = vmatprep.subr.mxu0 0.0
    %915 = vmatpush1.msra.mxu0 0.0
    %916 = vmatprep.subr.mxu0 0.0
    %917 = vmatpush1.msra.mxu0 0.0
    %918 = vmatprep.subr.mxu0 0.0
    %919 = vmatpush1.msra.mxu0 0.0
    %920 = vmatprep.subr.mxu0 0.0
    %921 = vmatpush1.msra.mxu0 0.0
    %922 = vmatprep.subr.mxu0 0.0
    %923 = vmatpush1.msra.mxu0 0.0
    %924 = vmatprep.subr.mxu0 0.0
    %925 = vmatpush1.msra.mxu0 0.0
    %926 = vmatprep.subr.mxu0 0.0
    %927 = vmatpush1.msra.mxu0 0.0
    %928 = vmatprep.subr.mxu0 0.0
    %929 = vmatpush1.msra.mxu0 0.0
    %930 = vmatprep.mubr.f32.mxu0 0.0
    %931 = vmatmul.mubr.f32.gmra.mrb[0].mxu0 %v788
    %v932 = vpop.f32.mrb[0].mxu0
    %v933 = vadd.f32 0.0, %v932
    %v934 = vpop.f32.mrb[0].mxu0
    %935 = vdwg.mxu0
    %v936 = vadd.f32 %v792, %v862
    %v937 = vadd.f32 %v793, %v864
    %v938 = vxor.u32 %v936, 2147483648
    %v939 = vxor.u32 %v937, 2147483648
    %v940 = vmul.f32 %v938, 1.442695
    %v941 = vpow.pop %v940
    %v942 = vmul.f32 %v939, 1.442695
    %v943 = vpow.pop %v942
    %v944 = vadd.f32 %v941, 1.0
    %v945 = vadd.f32 %v943, 1.0
    %v946 = vrcp.pop %v944
    %v947 = vmul.f32 1.0, %v946
    %v948 = vrcp.pop %v945
    %v949 = vmul.f32 1.0, %v948
    %v950 = vadd.f32 %v933, %v455
    %v951 = vmul.f32 %v947, %v950
    %v952 = vadd.f32 %v794, %v951
    %v953 = vtanh.pop %v952
    %v954 = vsub.f32 %v788, %v953
    %v955 = vmul.f32 %v949, %v954
    %v956 = vadd.f32 %v953, %v955
    %s957 = scalar_lea.vmem [#allocation11], 16
    %958 = vst [vmem:[%s957] sm:$0xff] %v956
    %s959 = scalar_lea.vmem [#allocation2], 72
    %v960 = vld [vmem:[%s959] sm:$0xff]
    %v961 = vld [vmem:[%s959 + $0x8] sm:$0xff]
    %v962 = vld [vmem:[%s959 + $0x10] sm:$0xff]
    %963 = vmatprep.subr.mxu0 %v403
    %964 = vmatpush1.msra.mxu0 %v402
    %965 = vmatprep.subr.mxu0 %v406
    %966 = vmatpush1.msra.mxu0 %v405
    %967 = vmatprep.subr.mxu0 %v409
    %968 = vmatpush1.msra.mxu0 %v408
    %969 = vmatprep.subr.mxu0 %v412
    %970 = vmatpush1.msra.mxu0 %v411
    %971 = vmatprep.subr.mxu0 %v415
    %972 = vmatpush1.msra.mxu0 %v414
    %973 = vmatprep.subr.mxu0 %v418
    %974 = vmatpush1.msra.mxu0 %v417
    %975 = vmatprep.subr.mxu0 %v421
    %976 = vmatpush1.msra.mxu0 %v420
    %977 = vmatprep.subr.mxu0 %v424
    %978 = vmatpush1.msra.mxu0 %v423
    %979 = vmatprep.subr.mxu0 %v427
    %980 = vmatpush1.msra.mxu0 %v426
    %981 = vmatprep.subr.mxu0 %v430
    %982 = vmatpush1.msra.mxu0 %v429
    %983 = vmatprep.subr.mxu0 %v433
    %984 = vmatpush1.msra.mxu0 %v432
    %985 = vmatprep.subr.mxu0 %v436
    %986 = vmatpush1.msra.mxu0 %v435
    %987 = vmatprep.subr.mxu0 %v439
    %988 = vmatpush1.msra.mxu0 %v438
    %989 = vmatprep.subr.mxu0 %v442
    %990 = vmatpush1.msra.mxu0 %v441
    %991 = vmatprep.subr.mxu0 %v445
    %992 = vmatpush1.msra.mxu0 %v444
    %993 = vmatprep.subr.mxu0 %v448
    %994 = vmatpush1.msra.mxu0 %v447
    %995 = vmatprep.subr.mxu0 0.0
    %996 = vmatpush1.msra.mxu0 0.0
    %997 = vmatprep.subr.mxu0 0.0
    %998 = vmatpush1.msra.mxu0 0.0
    %999 = vmatprep.subr.mxu0 0.0
    %1000 = vmatpush1.msra.mxu0 0.0
    %1001 = vmatprep.subr.mxu0 0.0
    %1002 = vmatpush1.msra.mxu0 0.0
    %1003 = vmatprep.subr.mxu0 0.0
    %1004 = vmatpush1.msra.mxu0 0.0
    %1005 = vmatprep.subr.mxu0 0.0
    %1006 = vmatpush1.msra.mxu0 0.0
    %1007 = vmatprep.subr.mxu0 0.0
    %1008 = vmatpush1.msra.mxu0 0.0
    %1009 = vmatprep.subr.mxu0 0.0
    %1010 = vmatpush1.msra.mxu0 0.0
    %1011 = vmatprep.subr.mxu0 0.0
    %1012 = vmatpush1.msra.mxu0 0.0
    %1013 = vmatprep.subr.mxu0 0.0
    %1014 = vmatpush1.msra.mxu0 0.0
    %1015 = vmatprep.subr.mxu0 0.0
    %1016 = vmatpush1.msra.mxu0 0.0
    %1017 = vmatprep.subr.mxu0 0.0
    %1018 = vmatpush1.msra.mxu0 0.0
    %1019 = vmatprep.subr.mxu0 0.0
    %1020 = vmatpush1.msra.mxu0 0.0
    %1021 = vmatprep.subr.mxu0 0.0
    %1022 = vmatpush1.msra.mxu0 0.0
    %1023 = vmatprep.subr.mxu0 0.0
    %1024 = vmatpush1.msra.mxu0 0.0
    %1025 = vmatprep.subr.mxu0 0.0
    %1026 = vmatpush1.msra.mxu0 0.0
    %1027 = vmatprep.mubr.f32.mxu0 0.0
    %1028 = vmatmul.mubr.f32.gmra.mrb[0].mxu0 %v956
    %v1029 = vpop.f32.mrb[0].mxu0
    %v1030 = vadd.f32 0.0, %v1029
    %v1031 = vpop.f32.mrb[0].mxu0
    %v1032 = vadd.f32 0.0, %v1031
    %1033 = vdwg.mxu0
    %1034 = vmatprep.subr.mxu0 0.0
    %1035 = vmatpush1.msra.mxu0 %v404
    %1036 = vmatprep.subr.mxu0 0.0
    %1037 = vmatpush1.msra.mxu0 %v407
    %1038 = vmatprep.subr.mxu0 0.0
    %1039 = vmatpush1.msra.mxu0 %v410
    %1040 = vmatprep.subr.mxu0 0.0
    %1041 = vmatpush1.msra.mxu0 %v413
    %1042 = vmatprep.subr.mxu0 0.0
    %1043 = vmatpush1.msra.mxu0 %v416
    %1044 = vmatprep.subr.mxu0 0.0
    %1045 = vmatpush1.msra.mxu0 %v419
    %1046 = vmatprep.subr.mxu0 0.0
    %1047 = vmatpush1.msra.mxu0 %v422
    %1048 = vmatprep.subr.mxu0 0.0
    %1049 = vmatpush1.msra.mxu0 %v425
    %1050 = vmatprep.subr.mxu0 0.0
    %1051 = vmatpush1.msra.mxu0 %v428
    %1052 = vmatprep.subr.mxu0 0.0
    %1053 = vmatpush1.msra.mxu0 %v431
    %1054 = vmatprep.subr.mxu0 0.0
    %1055 = vmatpush1.msra.mxu0 %v434
    %1056 = vmatprep.subr.mxu0 0.0
    %1057 = vmatpush1.msra.mxu0 %v437
    %1058 = vmatprep.subr.mxu0 0.0
    %1059 = vmatpush1.msra.mxu0 %v440
    %1060 = vmatprep.subr.mxu0 0.0
    %1061 = vmatpush1.msra.mxu0 %v443
    %1062 = vmatprep.subr.mxu0 0.0
    %1063 = vmatpush1.msra.mxu0 %v446
    %1064 = vmatprep.subr.mxu0 0.0
    %1065 = vmatpush1.msra.mxu0 %v449
    %1066 = vmatprep.subr.mxu0 0.0
    %1067 = vmatpush1.msra.mxu0 0.0
    %1068 = vmatprep.subr.mxu0 0.0
    %1069 = vmatpush1.msra.mxu0 0.0
    %1070 = vmatprep.subr.mxu0 0.0
    %1071 = vmatpush1.msra.mxu0 0.0
    %1072 = vmatprep.subr.mxu0 0.0
    %1073 = vmatpush1.msra.mxu0 0.0
    %1074 = vmatprep.subr.mxu0 0.0
    %1075 = vmatpush1.msra.mxu0 0.0
    %1076 = vmatprep.subr.mxu0 0.0
    %1077 = vmatpush1.msra.mxu0 0.0
    %1078 = vmatprep.subr.mxu0 0.0
    %1079 = vmatpush1.msra.mxu0 0.0
    %1080 = vmatprep.subr.mxu0 0.0
    %1081 = vmatpush1.msra.mxu0 0.0
    %1082 = vmatprep.subr.mxu0 0.0
    %1083 = vmatpush1.msra.mxu0 0.0
    %1084 = vmatprep.subr.mxu0 0.0
    %1085 = vmatpush1.msra.mxu0 0.0
    %1086 = vmatprep.subr.mxu0 0.0
    %1087 = vmatpush1.msra.mxu0 0.0
    %1088 = vmatprep.subr.mxu0 0.0
    %1089 = vmatpush1.msra.mxu0 0.0
    %1090 = vmatprep.subr.mxu0 0.0
    %1091 = vmatpush1.msra.mxu0 0.0
    %1092 = vmatprep.subr.mxu0 0.0
    %1093 = vmatpush1.msra.mxu0 0.0
    %1094 = vmatprep.subr.mxu0 0.0
    %1095 = vmatpush1.msra.mxu0 0.0
    %1096 = vmatprep.subr.mxu0 0.0
    %1097 = vmatpush1.msra.mxu0 0.0
    %1098 = vmatprep.mubr.f32.mxu0 0.0
    %1099 = vmatmul.mubr.f32.gmra.mrb[0].mxu0 %v956
    %v1100 = vpop.f32.mrb[0].mxu0
    %v1101 = vadd.f32 0.0, %v1100
    %v1102 = vpop.f32.mrb[0].mxu0
    %1103 = vdwg.mxu0
    %v1104 = vadd.f32 %v960, %v1030
    %v1105 = vadd.f32 %v961, %v1032
    %v1106 = vxor.u32 %v1104, 2147483648
    %v1107 = vxor.u32 %v1105, 2147483648
    %v1108 = vmul.f32 %v1106, 1.442695
    %v1109 = vpow.pop %v1108
    %v1110 = vmul.f32 %v1107, 1.442695
    %v1111 = vpow.pop %v1110
    %v1112 = vadd.f32 %v1109, 1.0
    %v1113 = vadd.f32 %v1111, 1.0
    %v1114 = vrcp.pop %v1112
    %v1115 = vmul.f32 1.0, %v1114
    %v1116 = vrcp.pop %v1113
    %v1117 = vmul.f32 1.0, %v1116
    %v1118 = vadd.f32 %v1101, %v455
    %v1119 = vmul.f32 %v1115, %v1118
    %v1120 = vadd.f32 %v962, %v1119
    %v1121 = vtanh.pop %v1120
    %v1122 = vsub.f32 %v956, %v1121
    %v1123 = vmul.f32 %v1117, %v1122
    %v1124 = vadd.f32 %v1121, %v1123
    %s1125 = scalar_lea.vmem [#allocation11], 24
    %1126 = vst [vmem:[%s1125] sm:$0xff] %v1124
    %s1127 = scalar_lea.vmem [#allocation2], 96
    %v1128 = vld [vmem:[%s1127] sm:$0xff]
    %v1129 = vld [vmem:[%s1127 + $0x8] sm:$0xff]
    %v1130 = vld [vmem:[%s1127 + $0x10] sm:$0xff]
    %1131 = vmatprep.subr.mxu0 %v403
    %1132 = vmatpush1.msra.mxu0 %v402
    %1133 = vmatprep.subr.mxu0 %v406
    %1134 = vmatpush1.msra.mxu0 %v405
    %1135 = vmatprep.subr.mxu0 %v409
    %1136 = vmatpush1.msra.mxu0 %v408
    %1137 = vmatprep.subr.mxu0 %v412
    %1138 = vmatpush1.msra.mxu0 %v411
    %1139 = vmatprep.subr.mxu0 %v415
    %1140 = vmatpush1.msra.mxu0 %v414
    %1141 = vmatprep.subr.mxu0 %v418
    %1142 = vmatpush1.msra.mxu0 %v417
    %1143 = vmatprep.subr.mxu0 %v421
    %1144 = vmatpush1.msra.mxu0 %v420
    %1145 = vmatprep.subr.mxu0 %v424
    %1146 = vmatpush1.msra.mxu0 %v423
    %1147 = vmatprep.subr.mxu0 %v427
    %1148 = vmatpush1.msra.mxu0 %v426
    %1149 = vmatprep.subr.mxu0 %v430
    %1150 = vmatpush1.msra.mxu0 %v429
    %1151 = vmatprep.subr.mxu0 %v433
    %1152 = vmatpush1.msra.mxu0 %v432
    %1153 = vmatprep.subr.mxu0 %v436
    %1154 = vmatpush1.msra.mxu0 %v435
    %1155 = vmatprep.subr.mxu0 %v439
    %1156 = vmatpush1.msra.mxu0 %v438
    %1157 = vmatprep.subr.mxu0 %v442
    %1158 = vmatpush1.msra.mxu0 %v441
    %1159 = vmatprep.subr.mxu0 %v445
    %1160 = vmatpush1.msra.mxu0 %v444
    %1161 = vmatprep.subr.mxu0 %v448
    %1162 = vmatpush1.msra.mxu0 %v447
    %1163 = vmatprep.subr.mxu0 0.0
    %1164 = vmatpush1.msra.mxu0 0.0
    %1165 = vmatprep.subr.mxu0 0.0
    %1166 = vmatpush1.msra.mxu0 0.0
    %1167 = vmatprep.subr.mxu0 0.0
    %1168 = vmatpush1.msra.mxu0 0.0
    %1169 = vmatprep.subr.mxu0 0.0
    %1170 = vmatpush1.msra.mxu0 0.0
    %1171 = vmatprep.subr.mxu0 0.0
    %1172 = vmatpush1.msra.mxu0 0.0
    %1173 = vmatprep.subr.mxu0 0.0
    %1174 = vmatpush1.msra.mxu0 0.0
    %1175 = vmatprep.subr.mxu0 0.0
    %1176 = vmatpush1.msra.mxu0 0.0
    %1177 = vmatprep.subr.mxu0 0.0
    %1178 = vmatpush1.msra.mxu0 0.0
    %1179 = vmatprep.subr.mxu0 0.0
    %1180 = vmatpush1.msra.mxu0 0.0
    %1181 = vmatprep.subr.mxu0 0.0
    %1182 = vmatpush1.msra.mxu0 0.0
    %1183 = vmatprep.subr.mxu0 0.0
    %1184 = vmatpush1.msra.mxu0 0.0
    %1185 = vmatprep.subr.mxu0 0.0
    %1186 = vmatpush1.msra.mxu0 0.0
    %1187 = vmatprep.subr.mxu0 0.0
    %1188 = vmatpush1.msra.mxu0 0.0
    %1189 = vmatprep.subr.mxu0 0.0
    %1190 = vmatpush1.msra.mxu0 0.0
    %1191 = vmatprep.subr.mxu0 0.0
    %1192 = vmatpush1.msra.mxu0 0.0
    %1193 = vmatprep.subr.mxu0 0.0
    %1194 = vmatpush1.msra.mxu0 0.0
    %1195 = vmatprep.mubr.f32.mxu0 0.0
    %1196 = vmatmul.mubr.f32.gmra.mrb[0].mxu0 %v1124
    %v1197 = vpop.f32.mrb[0].mxu0
    %v1198 = vadd.f32 0.0, %v1197
    %v1199 = vpop.f32.mrb[0].mxu0
    %v1200 = vadd.f32 0.0, %v1199
    %1201 = vdwg.mxu0
    %1202 = vmatprep.subr.mxu0 0.0
    %1203 = vmatpush1.msra.mxu0 %v404
    %1204 = vmatprep.subr.mxu0 0.0
    %1205 = vmatpush1.msra.mxu0 %v407
    %1206 = vmatprep.subr.mxu0 0.0
    %1207 = vmatpush1.msra.mxu0 %v410
    %1208 = vmatprep.subr.mxu0 0.0
    %1209 = vmatpush1.msra.mxu0 %v413
    %1210 = vmatprep.subr.mxu0 0.0
    %1211 = vmatpush1.msra.mxu0 %v416
    %1212 = vmatprep.subr.mxu0 0.0
    %1213 = vmatpush1.msra.mxu0 %v419
    %1214 = vmatprep.subr.mxu0 0.0
    %1215 = vmatpush1.msra.mxu0 %v422
    %1216 = vmatprep.subr.mxu0 0.0
    %1217 = vmatpush1.msra.mxu0 %v425
    %1218 = vmatprep.subr.mxu0 0.0
    %1219 = vmatpush1.msra.mxu0 %v428
    %1220 = vmatprep.subr.mxu0 0.0
    %1221 = vmatpush1.msra.mxu0 %v431
    %1222 = vmatprep.subr.mxu0 0.0
    %1223 = vmatpush1.msra.mxu0 %v434
    %1224 = vmatprep.subr.mxu0 0.0
    %1225 = vmatpush1.msra.mxu0 %v437
    %1226 = vmatprep.subr.mxu0 0.0
    %1227 = vmatpush1.msra.mxu0 %v440
    %1228 = vmatprep.subr.mxu0 0.0
    %1229 = vmatpush1.msra.mxu0 %v443
    %1230 = vmatprep.subr.mxu0 0.0
    %1231 = vmatpush1.msra.mxu0 %v446
    %1232 = vmatprep.subr.mxu0 0.0
    %1233 = vmatpush1.msra.mxu0 %v449
    %1234 = vmatprep.subr.mxu0 0.0
    %1235 = vmatpush1.msra.mxu0 0.0
    %1236 = vmatprep.subr.mxu0 0.0
    %1237 = vmatpush1.msra.mxu0 0.0
    %1238 = vmatprep.subr.mxu0 0.0
    %1239 = vmatpush1.msra.mxu0 0.0
    %1240 = vmatprep.subr.mxu0 0.0
    %1241 = vmatpush1.msra.mxu0 0.0
    %1242 = vmatprep.subr.mxu0 0.0
    %1243 = vmatpush1.msra.mxu0 0.0
    %1244 = vmatprep.subr.mxu0 0.0
    %1245 = vmatpush1.msra.mxu0 0.0
    %1246 = vmatprep.subr.mxu0 0.0
    %1247 = vmatpush1.msra.mxu0 0.0
    %1248 = vmatprep.subr.mxu0 0.0
    %1249 = vmatpush1.msra.mxu0 0.0
    %1250 = vmatprep.subr.mxu0 0.0
    %1251 = vmatpush1.msra.mxu0 0.0
    %1252 = vmatprep.subr.mxu0 0.0
    %1253 = vmatpush1.msra.mxu0 0.0
    %1254 = vmatprep.subr.mxu0 0.0
    %1255 = vmatpush1.msra.mxu0 0.0
    %1256 = vmatprep.subr.mxu0 0.0
    %1257 = vmatpush1.msra.mxu0 0.0
    %1258 = vmatprep.subr.mxu0 0.0
    %1259 = vmatpush1.msra.mxu0 0.0
    %1260 = vmatprep.subr.mxu0 0.0
    %1261 = vmatpush1.msra.mxu0 0.0
    %1262 = vmatprep.subr.mxu0 0.0
    %1263 = vmatpush1.msra.mxu0 0.0
    %1264 = vmatprep.subr.mxu0 0.0
    %1265 = vmatpush1.msra.mxu0 0.0
    %1266 = vmatprep.mubr.f32.mxu0 0.0
    %1267 = vmatmul.mubr.f32.gmra.mrb[0].mxu0 %v1124
    %v1268 = vpop.f32.mrb[0].mxu0
    %v1269 = vadd.f32 0.0, %v1268
    %v1270 = vpop.f32.mrb[0].mxu0
    %1271 = vdwg.mxu0
    %v1272 = vadd.f32 %v1128, %v1198
    %v1273 = vadd.f32 %v1129, %v1200
    %v1274 = vxor.u32 %v1272, 2147483648
    %v1275 = vxor.u32 %v1273, 2147483648
    %v1276 = vmul.f32 %v1274, 1.442695
    %v1277 = vpow.pop %v1276
    %v1278 = vmul.f32 %v1275, 1.442695
    %v1279 = vpow.pop %v1278
    %v1280 = vadd.f32 %v1277, 1.0
    %v1281 = vadd.f32 %v1279, 1.0
    %v1282 = vrcp.pop %v1280
    %v1283 = vmul.f32 1.0, %v1282
    %v1284 = vrcp.pop %v1281
    %v1285 = vmul.f32 1.0, %v1284
    %v1286 = vadd.f32 %v1269, %v455
    %v1287 = vmul.f32 %v1283, %v1286
    %v1288 = vadd.f32 %v1130, %v1287
    %v1289 = vtanh.pop %v1288
    %v1290 = vsub.f32 %v1124, %v1289
    %v1291 = vmul.f32 %v1285, %v1290
    %v1292 = vadd.f32 %v1289, %v1291
    %s1293 = scalar_lea.vmem [#allocation11], 32
    %1294 = vst [vmem:[%s1293] sm:$0xff] %v1292
    %s1295 = scalar_lea.vmem [#allocation2], 120
    %v1296 = vld [vmem:[%s1295] sm:$0xff]
    %v1297 = vld [vmem:[%s1295 + $0x8] sm:$0xff]
    %v1298 = vld [vmem:[%s1295 + $0x10] sm:$0xff]
    %1299 = vmatprep.subr.mxu0 %v403
    %1300 = vmatpush1.msra.mxu0 %v402
    %1301 = vmatprep.subr.mxu0 %v406
    %1302 = vmatpush1.msra.mxu0 %v405
    %1303 = vmatprep.subr.mxu0 %v409
    %1304 = vmatpush1.msra.mxu0 %v408
    %1305 = vmatprep.subr.mxu0 %v412
    %1306 = vmatpush1.msra.mxu0 %v411
    %1307 = vmatprep.subr.mxu0 %v415
    %1308 = vmatpush1.msra.mxu0 %v414
    %1309 = vmatprep.subr.mxu0 %v418
    %1310 = vmatpush1.msra.mxu0 %v417
    %1311 = vmatprep.subr.mxu0 %v421
    %1312 = vmatpush1.msra.mxu0 %v420
    %1313 = vmatprep.subr.mxu0 %v424
    %1314 = vmatpush1.msra.mxu0 %v423
    %1315 = vmatprep.subr.mxu0 %v427
    %1316 = vmatpush1.msra.mxu0 %v426
    %1317 = vmatprep.subr.mxu0 %v430
    %1318 = vmatpush1.msra.mxu0 %v429
    %1319 = vmatprep.subr.mxu0 %v433
    %1320 = vmatpush1.msra.mxu0 %v432
    %1321 = vmatprep.subr.mxu0 %v436
    %1322 = vmatpush1.msra.mxu0 %v435
    %1323 = vmatprep.subr.mxu0 %v439
    %1324 = vmatpush1.msra.mxu0 %v438
    %1325 = vmatprep.subr.mxu0 %v442
    %1326 = vmatpush1.msra.mxu0 %v441
    %1327 = vmatprep.subr.mxu0 %v445
    %1328 = vmatpush1.msra.mxu0 %v444
    %1329 = vmatprep.subr.mxu0 %v448
    %1330 = vmatpush1.msra.mxu0 %v447
    %1331 = vmatprep.subr.mxu0 0.0
    %1332 = vmatpush1.msra.mxu0 0.0
    %1333 = vmatprep.subr.mxu0 0.0
    %1334 = vmatpush1.msra.mxu0 0.0
    %1335 = vmatprep.subr.mxu0 0.0
    %1336 = vmatpush1.msra.mxu0 0.0
    %1337 = vmatprep.subr.mxu0 0.0
    %1338 = vmatpush1.msra.mxu0 0.0
    %1339 = vmatprep.subr.mxu0 0.0
    %1340 = vmatpush1.msra.mxu0 0.0
    %1341 = vmatprep.subr.mxu0 0.0
    %1342 = vmatpush1.msra.mxu0 0.0
    %1343 = vmatprep.subr.mxu0 0.0
    %1344 = vmatpush1.msra.mxu0 0.0
    %1345 = vmatprep.subr.mxu0 0.0
    %1346 = vmatpush1.msra.mxu0 0.0
    %1347 = vmatprep.subr.mxu0 0.0
    %1348 = vmatpush1.msra.mxu0 0.0
    %1349 = vmatprep.subr.mxu0 0.0
    %1350 = vmatpush1.msra.mxu0 0.0
    %1351 = vmatprep.subr.mxu0 0.0
    %1352 = vmatpush1.msra.mxu0 0.0
    %1353 = vmatprep.subr.mxu0 0.0
    %1354 = vmatpush1.msra.mxu0 0.0
    %1355 = vmatprep.subr.mxu0 0.0
    %1356 = vmatpush1.msra.mxu0 0.0
    %1357 = vmatprep.subr.mxu0 0.0
    %1358 = vmatpush1.msra.mxu0 0.0
    %1359 = vmatprep.subr.mxu0 0.0
    %1360 = vmatpush1.msra.mxu0 0.0
    %1361 = vmatprep.subr.mxu0 0.0
    %1362 = vmatpush1.msra.mxu0 0.0
    %1363 = vmatprep.mubr.f32.mxu0 0.0
    %1364 = vmatmul.mubr.f32.gmra.mrb[0].mxu0 %v1292
    %v1365 = vpop.f32.mrb[0].mxu0
    %v1366 = vadd.f32 0.0, %v1365
    %v1367 = vpop.f32.mrb[0].mxu0
    %v1368 = vadd.f32 0.0, %v1367
    %1369 = vdwg.mxu0
    %1370 = vmatprep.subr.mxu0 0.0
    %1371 = vmatpush1.msra.mxu0 %v404
    %1372 = vmatprep.subr.mxu0 0.0
    %1373 = vmatpush1.msra.mxu0 %v407
    %1374 = vmatprep.subr.mxu0 0.0
    %1375 = vmatpush1.msra.mxu0 %v410
    %1376 = vmatprep.subr.mxu0 0.0
    %1377 = vmatpush1.msra.mxu0 %v413
    %1378 = vmatprep.subr.mxu0 0.0
    %1379 = vmatpush1.msra.mxu0 %v416
    %1380 = vmatprep.subr.mxu0 0.0
    %1381 = vmatpush1.msra.mxu0 %v419
    %1382 = vmatprep.subr.mxu0 0.0
    %1383 = vmatpush1.msra.mxu0 %v422
    %1384 = vmatprep.subr.mxu0 0.0
    %1385 = vmatpush1.msra.mxu0 %v425
    %1386 = vmatprep.subr.mxu0 0.0
    %1387 = vmatpush1.msra.mxu0 %v428
    %1388 = vmatprep.subr.mxu0 0.0
    %1389 = vmatpush1.msra.mxu0 %v431
    %1390 = vmatprep.subr.mxu0 0.0
    %1391 = vmatpush1.msra.mxu0 %v434
    %1392 = vmatprep.subr.mxu0 0.0
    %1393 = vmatpush1.msra.mxu0 %v437
    %1394 = vmatprep.subr.mxu0 0.0
    %1395 = vmatpush1.msra.mxu0 %v440
    %1396 = vmatprep.subr.mxu0 0.0
    %1397 = vmatpush1.msra.mxu0 %v443
    %1398 = vmatprep.subr.mxu0 0.0
    %1399 = vmatpush1.msra.mxu0 %v446
    %1400 = vmatprep.subr.mxu0 0.0
    %1401 = vmatpush1.msra.mxu0 %v449
    %1402 = vmatprep.subr.mxu0 0.0
    %1403 = vmatpush1.msra.mxu0 0.0
    %1404 = vmatprep.subr.mxu0 0.0
    %1405 = vmatpush1.msra.mxu0 0.0
    %1406 = vmatprep.subr.mxu0 0.0
    %1407 = vmatpush1.msra.mxu0 0.0
    %1408 = vmatprep.subr.mxu0 0.0
    %1409 = vmatpush1.msra.mxu0 0.0
    %1410 = vmatprep.subr.mxu0 0.0
    %1411 = vmatpush1.msra.mxu0 0.0
    %1412 = vmatprep.subr.mxu0 0.0
    %1413 = vmatpush1.msra.mxu0 0.0
    %1414 = vmatprep.subr.mxu0 0.0
    %1415 = vmatpush1.msra.mxu0 0.0
    %1416 = vmatprep.subr.mxu0 0.0
    %1417 = vmatpush1.msra.mxu0 0.0
    %1418 = vmatprep.subr.mxu0 0.0
    %1419 = vmatpush1.msra.mxu0 0.0
    %1420 = vmatprep.subr.mxu0 0.0
    %1421 = vmatpush1.msra.mxu0 0.0
    %1422 = vmatprep.subr.mxu0 0.0
    %1423 = vmatpush1.msra.mxu0 0.0
    %1424 = vmatprep.subr.mxu0 0.0
    %1425 = vmatpush1.msra.mxu0 0.0
    %1426 = vmatprep.subr.mxu0 0.0
    %1427 = vmatpush1.msra.mxu0 0.0
    %1428 = vmatprep.subr.mxu0 0.0
    %1429 = vmatpush1.msra.mxu0 0.0
    %1430 = vmatprep.subr.mxu0 0.0
    %1431 = vmatpush1.msra.mxu0 0.0
    %1432 = vmatprep.subr.mxu0 0.0
    %1433 = vmatpush1.msra.mxu0 0.0
    %1434 = vmatprep.mubr.f32.mxu0 0.0
    %1435 = vmatmul.mubr.f32.gmra.mrb[0].mxu0 %v1292
    %v1436 = vpop.f32.mrb[0].mxu0
    %v1437 = vadd.f32 0.0, %v1436
    %v1438 = vpop.f32.mrb[0].mxu0
    %1439 = vdwg.mxu0
    %v1440 = vadd.f32 %v1296, %v1366
    %v1441 = vadd.f32 %v1297, %v1368
    %v1442 = vxor.u32 %v1440, 2147483648
    %v1443 = vxor.u32 %v1441, 2147483648
    %v1444 = vmul.f32 %v1442, 1.442695
    %v1445 = vpow.pop %v1444
    %v1446 = vmul.f32 %v1443, 1.442695
    %v1447 = vpow.pop %v1446
    %v1448 = vadd.f32 %v1445, 1.0
    %v1449 = vadd.f32 %v1447, 1.0
    %v1450 = vrcp.pop %v1448
    %v1451 = vmul.f32 1.0, %v1450
    %v1452 = vrcp.pop %v1449
    %v1453 = vmul.f32 1.0, %v1452
    %v1454 = vadd.f32 %v1437, %v455
    %v1455 = vmul.f32 %v1451, %v1454
    %v1456 = vadd.f32 %v1298, %v1455
    %v1457 = vtanh.pop %v1456
    %v1458 = vsub.f32 %v1292, %v1457
    %v1459 = vmul.f32 %v1453, %v1458
    %v1460 = vadd.f32 %v1457, %v1459
    %s1461 = scalar_lea.vmem [#allocation11], 40
    %1462 = vst [vmem:[%s1461] sm:$0xff] %v1460
    %s1463 = scalar_lea.vmem [#allocation2], 144
    %v1464 = vld [vmem:[%s1463] sm:$0xff]
    %v1465 = vld [vmem:[%s1463 + $0x8] sm:$0xff]
    %v1466 = vld [vmem:[%s1463 + $0x10] sm:$0xff]
    %1467 = vmatprep.subr.mxu0 %v403
    %1468 = vmatpush1.msra.mxu0 %v402
    %1469 = vmatprep.subr.mxu0 %v406
    %1470 = vmatpush1.msra.mxu0 %v405
    %1471 = vmatprep.subr.mxu0 %v409
    %1472 = vmatpush1.msra.mxu0 %v408
    %1473 = vmatprep.subr.mxu0 %v412
    %1474 = vmatpush1.msra.mxu0 %v411
    %1475 = vmatprep.subr.mxu0 %v415
    %1476 = vmatpush1.msra.mxu0 %v414
    %1477 = vmatprep.subr.mxu0 %v418
    %1478 = vmatpush1.msra.mxu0 %v417
    %1479 = vmatprep.subr.mxu0 %v421
    %1480 = vmatpush1.msra.mxu0 %v420
    %1481 = vmatprep.subr.mxu0 %v424
    %1482 = vmatpush1.msra.mxu0 %v423
    %1483 = vmatprep.subr.mxu0 %v427
    %1484 = vmatpush1.msra.mxu0 %v426
    %1485 = vmatprep.subr.mxu0 %v430
    %1486 = vmatpush1.msra.mxu0 %v429
    %1487 = vmatprep.subr.mxu0 %v433
    %1488 = vmatpush1.msra.mxu0 %v432
    %1489 = vmatprep.subr.mxu0 %v436
    %1490 = vmatpush1.msra.mxu0 %v435
    %1491 = vmatprep.subr.mxu0 %v439
    %1492 = vmatpush1.msra.mxu0 %v438
    %1493 = vmatprep.subr.mxu0 %v442
    %1494 = vmatpush1.msra.mxu0 %v441
    %1495 = vmatprep.subr.mxu0 %v445
    %1496 = vmatpush1.msra.mxu0 %v444
    %1497 = vmatprep.subr.mxu0 %v448
    %1498 = vmatpush1.msra.mxu0 %v447
    %1499 = vmatprep.subr.mxu0 0.0
    %1500 = vmatpush1.msra.mxu0 0.0
    %1501 = vmatprep.subr.mxu0 0.0
    %1502 = vmatpush1.msra.mxu0 0.0
    %1503 = vmatprep.subr.mxu0 0.0
    %1504 = vmatpush1.msra.mxu0 0.0
    %1505 = vmatprep.subr.mxu0 0.0
    %1506 = vmatpush1.msra.mxu0 0.0
    %1507 = vmatprep.subr.mxu0 0.0
    %1508 = vmatpush1.msra.mxu0 0.0
    %1509 = vmatprep.subr.mxu0 0.0
    %1510 = vmatpush1.msra.mxu0 0.0
    %1511 = vmatprep.subr.mxu0 0.0
    %1512 = vmatpush1.msra.mxu0 0.0
    %1513 = vmatprep.subr.mxu0 0.0
    %1514 = vmatpush1.msra.mxu0 0.0
    %1515 = vmatprep.subr.mxu0 0.0
    %1516 = vmatpush1.msra.mxu0 0.0
    %1517 = vmatprep.subr.mxu0 0.0
    %1518 = vmatpush1.msra.mxu0 0.0
    %1519 = vmatprep.subr.mxu0 0.0
    %1520 = vmatpush1.msra.mxu0 0.0
    %1521 = vmatprep.subr.mxu0 0.0
    %1522 = vmatpush1.msra.mxu0 0.0
    %1523 = vmatprep.subr.mxu0 0.0
    %1524 = vmatpush1.msra.mxu0 0.0
    %1525 = vmatprep.subr.mxu0 0.0
    %1526 = vmatpush1.msra.mxu0 0.0
    %1527 = vmatprep.subr.mxu0 0.0
    %1528 = vmatpush1.msra.mxu0 0.0
    %1529 = vmatprep.subr.mxu0 0.0
    %1530 = vmatpush1.msra.mxu0 0.0
    %1531 = vmatprep.mubr.f32.mxu0 0.0
    %1532 = vmatmul.mubr.f32.gmra.mrb[0].mxu0 %v1460
    %v1533 = vpop.f32.mrb[0].mxu0
    %v1534 = vadd.f32 0.0, %v1533
    %v1535 = vpop.f32.mrb[0].mxu0
    %v1536 = vadd.f32 0.0, %v1535
    %1537 = vdwg.mxu0
    %1538 = vmatprep.subr.mxu0 0.0
    %1539 = vmatpush1.msra.mxu0 %v404
    %1540 = vmatprep.subr.mxu0 0.0
    %1541 = vmatpush1.msra.mxu0 %v407
    %1542 = vmatprep.subr.mxu0 0.0
    %1543 = vmatpush1.msra.mxu0 %v410
    %1544 = vmatprep.subr.mxu0 0.0
    %1545 = vmatpush1.msra.mxu0 %v413
    %1546 = vmatprep.subr.mxu0 0.0
    %1547 = vmatpush1.msra.mxu0 %v416
    %1548 = vmatprep.subr.mxu0 0.0
    %1549 = vmatpush1.msra.mxu0 %v419
    %1550 = vmatprep.subr.mxu0 0.0
    %1551 = vmatpush1.msra.mxu0 %v422
    %1552 = vmatprep.subr.mxu0 0.0
    %1553 = vmatpush1.msra.mxu0 %v425
    %1554 = vmatprep.subr.mxu0 0.0
    %1555 = vmatpush1.msra.mxu0 %v428
    %1556 = vmatprep.subr.mxu0 0.0
    %1557 = vmatpush1.msra.mxu0 %v431
    %1558 = vmatprep.subr.mxu0 0.0
    %1559 = vmatpush1.msra.mxu0 %v434
    %1560 = vmatprep.subr.mxu0 0.0
    %1561 = vmatpush1.msra.mxu0 %v437
    %1562 = vmatprep.subr.mxu0 0.0
    %1563 = vmatpush1.msra.mxu0 %v440
    %1564 = vmatprep.subr.mxu0 0.0
    %1565 = vmatpush1.msra.mxu0 %v443
    %1566 = vmatprep.subr.mxu0 0.0
    %1567 = vmatpush1.msra.mxu0 %v446
    %1568 = vmatprep.subr.mxu0 0.0
    %1569 = vmatpush1.msra.mxu0 %v449
    %1570 = vmatprep.subr.mxu0 0.0
    %1571 = vmatpush1.msra.mxu0 0.0
    %1572 = vmatprep.subr.mxu0 0.0
    %1573 = vmatpush1.msra.mxu0 0.0
    %1574 = vmatprep.subr.mxu0 0.0
    %1575 = vmatpush1.msra.mxu0 0.0
    %1576 = vmatprep.subr.mxu0 0.0
    %1577 = vmatpush1.msra.mxu0 0.0
    %1578 = vmatprep.subr.mxu0 0.0
    %1579 = vmatpush1.msra.mxu0 0.0
    %1580 = vmatprep.subr.mxu0 0.0
    %1581 = vmatpush1.msra.mxu0 0.0
    %1582 = vmatprep.subr.mxu0 0.0
    %1583 = vmatpush1.msra.mxu0 0.0
    %1584 = vmatprep.subr.mxu0 0.0
    %1585 = vmatpush1.msra.mxu0 0.0
    %1586 = vmatprep.subr.mxu0 0.0
    %1587 = vmatpush1.msra.mxu0 0.0
    %1588 = vmatprep.subr.mxu0 0.0
    %1589 = vmatpush1.msra.mxu0 0.0
    %1590 = vmatprep.subr.mxu0 0.0
    %1591 = vmatpush1.msra.mxu0 0.0
    %1592 = vmatprep.subr.mxu0 0.0
    %1593 = vmatpush1.msra.mxu0 0.0
    %1594 = vmatprep.subr.mxu0 0.0
    %1595 = vmatpush1.msra.mxu0 0.0
    %1596 = vmatprep.subr.mxu0 0.0
    %1597 = vmatpush1.msra.mxu0 0.0
    %1598 = vmatprep.subr.mxu0 0.0
    %1599 = vmatpush1.msra.mxu0 0.0
    %1600 = vmatprep.subr.mxu0 0.0
    %1601 = vmatpush1.msra.mxu0 0.0
    %1602 = vmatprep.mubr.f32.mxu0 0.0
    %1603 = vmatmul.mubr.f32.gmra.mrb[0].mxu0 %v1460
    %v1604 = vpop.f32.mrb[0].mxu0
    %v1605 = vadd.f32 0.0, %v1604
    %v1606 = vpop.f32.mrb[0].mxu0
    %1607 = vdwg.mxu0
    %v1608 = vadd.f32 %v1464, %v1534
    %v1609 = vadd.f32 %v1465, %v1536
    %v1610 = vxor.u32 %v1608, 2147483648
    %v1611 = vxor.u32 %v1609, 2147483648
    %v1612 = vmul.f32 %v1610, 1.442695
    %v1613 = vpow.pop %v1612
    %v1614 = vmul.f32 %v1611, 1.442695
    %v1615 = vpow.pop %v1614
    %v1616 = vadd.f32 %v1613, 1.0
    %v1617 = vadd.f32 %v1615, 1.0
    %v1618 = vrcp.pop %v1616
    %v1619 = vmul.f32 1.0, %v1618
    %v1620 = vrcp.pop %v1617
    %v1621 = vmul.f32 1.0, %v1620
    %v1622 = vadd.f32 %v1605, %v455
    %v1623 = vmul.f32 %v1619, %v1622
    %v1624 = vadd.f32 %v1466, %v1623
    %v1625 = vtanh.pop %v1624
    %v1626 = vsub.f32 %v1460, %v1625
    %v1627 = vmul.f32 %v1621, %v1626
    %v1628 = vadd.f32 %v1625, %v1627
    %s1629 = scalar_lea.vmem [#allocation11], 48
    %1630 = vst [vmem:[%s1629] sm:$0xff] %v1628
    %s1631 = scalar_lea.vmem [#allocation2], 168
    %v1632 = vld [vmem:[%s1631] sm:$0xff]
    %v1633 = vld [vmem:[%s1631 + $0x8] sm:$0xff]
    %v1634 = vld [vmem:[%s1631 + $0x10] sm:$0xff]
    %1635 = vmatprep.subr.mxu0 %v403
    %1636 = vmatpush1.msra.mxu0 %v402
    %1637 = vmatprep.subr.mxu0 %v406
    %1638 = vmatpush1.msra.mxu0 %v405
    %1639 = vmatprep.subr.mxu0 %v409
    %1640 = vmatpush1.msra.mxu0 %v408
    %1641 = vmatprep.subr.mxu0 %v412
    %1642 = vmatpush1.msra.mxu0 %v411
    %1643 = vmatprep.subr.mxu0 %v415
    %1644 = vmatpush1.msra.mxu0 %v414
    %1645 = vmatprep.subr.mxu0 %v418
    %1646 = vmatpush1.msra.mxu0 %v417
    %1647 = vmatprep.subr.mxu0 %v421
    %1648 = vmatpush1.msra.mxu0 %v420
    %1649 = vmatprep.subr.mxu0 %v424
    %1650 = vmatpush1.msra.mxu0 %v423
    %1651 = vmatprep.subr.mxu0 %v427
    %1652 = vmatpush1.msra.mxu0 %v426
    %1653 = vmatprep.subr.mxu0 %v430
    %1654 = vmatpush1.msra.mxu0 %v429
    %1655 = vmatprep.subr.mxu0 %v433
    %1656 = vmatpush1.msra.mxu0 %v432
    %1657 = vmatprep.subr.mxu0 %v436
    %1658 = vmatpush1.msra.mxu0 %v435
    %1659 = vmatprep.subr.mxu0 %v439
    %1660 = vmatpush1.msra.mxu0 %v438
    %1661 = vmatprep.subr.mxu0 %v442
    %1662 = vmatpush1.msra.mxu0 %v441
    %1663 = vmatprep.subr.mxu0 %v445
    %1664 = vmatpush1.msra.mxu0 %v444
    %1665 = vmatprep.subr.mxu0 %v448
    %1666 = vmatpush1.msra.mxu0 %v447
    %1667 = vmatprep.subr.mxu0 0.0
    %1668 = vmatpush1.msra.mxu0 0.0
    %1669 = vmatprep.subr.mxu0 0.0
    %1670 = vmatpush1.msra.mxu0 0.0
    %1671 = vmatprep.subr.mxu0 0.0
    %1672 = vmatpush1.msra.mxu0 0.0
    %1673 = vmatprep.subr.mxu0 0.0
    %1674 = vmatpush1.msra.mxu0 0.0
    %1675 = vmatprep.subr.mxu0 0.0
    %1676 = vmatpush1.msra.mxu0 0.0
    %1677 = vmatprep.subr.mxu0 0.0
    %1678 = vmatpush1.msra.mxu0 0.0
    %1679 = vmatprep.subr.mxu0 0.0
    %1680 = vmatpush1.msra.mxu0 0.0
    %1681 = vmatprep.subr.mxu0 0.0
    %1682 = vmatpush1.msra.mxu0 0.0
    %1683 = vmatprep.subr.mxu0 0.0
    %1684 = vmatpush1.msra.mxu0 0.0
    %1685 = vmatprep.subr.mxu0 0.0
    %1686 = vmatpush1.msra.mxu0 0.0
    %1687 = vmatprep.subr.mxu0 0.0
    %1688 = vmatpush1.msra.mxu0 0.0
    %1689 = vmatprep.subr.mxu0 0.0
    %1690 = vmatpush1.msra.mxu0 0.0
    %1691 = vmatprep.subr.mxu0 0.0
    %1692 = vmatpush1.msra.mxu0 0.0
    %1693 = vmatprep.subr.mxu0 0.0
    %1694 = vmatpush1.msra.mxu0 0.0
    %1695 = vmatprep.subr.mxu0 0.0
    %1696 = vmatpush1.msra.mxu0 0.0
    %1697 = vmatprep.subr.mxu0 0.0
    %1698 = vmatpush1.msra.mxu0 0.0
    %1699 = vmatprep.mubr.f32.mxu0 0.0
    %1700 = vmatmul.mubr.f32.gmra.mrb[0].mxu0 %v1628
    %v1701 = vpop.f32.mrb[0].mxu0
    %v1702 = vadd.f32 0.0, %v1701
    %v1703 = vpop.f32.mrb[0].mxu0
    %v1704 = vadd.f32 0.0, %v1703
    %1705 = vdwg.mxu0
    %1706 = vmatprep.subr.mxu0 0.0
    %1707 = vmatpush1.msra.mxu0 %v404
    %1708 = vmatprep.subr.mxu0 0.0
    %1709 = vmatpush1.msra.mxu0 %v407
    %1710 = vmatprep.subr.mxu0 0.0
    %1711 = vmatpush1.msra.mxu0 %v410
    %1712 = vmatprep.subr.mxu0 0.0
    %1713 = vmatpush1.msra.mxu0 %v413
    %1714 = vmatprep.subr.mxu0 0.0
    %1715 = vmatpush1.msra.mxu0 %v416
    %1716 = vmatprep.subr.mxu0 0.0
    %1717 = vmatpush1.msra.mxu0 %v419
    %1718 = vmatprep.subr.mxu0 0.0
    %1719 = vmatpush1.msra.mxu0 %v422
    %1720 = vmatprep.subr.mxu0 0.0
    %1721 = vmatpush1.msra.mxu0 %v425
    %1722 = vmatprep.subr.mxu0 0.0
    %1723 = vmatpush1.msra.mxu0 %v428
    %1724 = vmatprep.subr.mxu0 0.0
    %1725 = vmatpush1.msra.mxu0 %v431
    %1726 = vmatprep.subr.mxu0 0.0
    %1727 = vmatpush1.msra.mxu0 %v434
    %1728 = vmatprep.subr.mxu0 0.0
    %1729 = vmatpush1.msra.mxu0 %v437
    %1730 = vmatprep.subr.mxu0 0.0
    %1731 = vmatpush1.msra.mxu0 %v440
    %1732 = vmatprep.subr.mxu0 0.0
    %1733 = vmatpush1.msra.mxu0 %v443
    %1734 = vmatprep.subr.mxu0 0.0
    %1735 = vmatpush1.msra.mxu0 %v446
    %1736 = vmatprep.subr.mxu0 0.0
    %1737 = vmatpush1.msra.mxu0 %v449
    %1738 = vmatprep.subr.mxu0 0.0
    %1739 = vmatpush1.msra.mxu0 0.0
    %1740 = vmatprep.subr.mxu0 0.0
    %1741 = vmatpush1.msra.mxu0 0.0
    %1742 = vmatprep.subr.mxu0 0.0
    %1743 = vmatpush1.msra.mxu0 0.0
    %1744 = vmatprep.subr.mxu0 0.0
    %1745 = vmatpush1.msra.mxu0 0.0
    %1746 = vmatprep.subr.mxu0 0.0
    %1747 = vmatpush1.msra.mxu0 0.0
    %1748 = vmatprep.subr.mxu0 0.0
    %1749 = vmatpush1.msra.mxu0 0.0
    %1750 = vmatprep.subr.mxu0 0.0
    %1751 = vmatpush1.msra.mxu0 0.0
    %1752 = vmatprep.subr.mxu0 0.0
    %1753 = vmatpush1.msra.mxu0 0.0
    %1754 = vmatprep.subr.mxu0 0.0
    %1755 = vmatpush1.msra.mxu0 0.0
    %1756 = vmatprep.subr.mxu0 0.0
    %1757 = vmatpush1.msra.mxu0 0.0
    %1758 = vmatprep.subr.mxu0 0.0
    %1759 = vmatpush1.msra.mxu0 0.0
    %1760 = vmatprep.subr.mxu0 0.0
    %1761 = vmatpush1.msra.mxu0 0.0
    %1762 = vmatprep.subr.mxu0 0.0
    %1763 = vmatpush1.msra.mxu0 0.0
    %1764 = vmatprep.subr.mxu0 0.0
    %1765 = vmatpush1.msra.mxu0 0.0
    %1766 = vmatprep.subr.mxu0 0.0
    %1767 = vmatpush1.msra.mxu0 0.0
    %1768 = vmatprep.subr.mxu0 0.0
    %1769 = vmatpush1.msra.mxu0 0.0
    %1770 = vmatprep.mubr.f32.mxu0 0.0
    %1771 = vmatmul.mubr.f32.gmra.mrb[0].mxu0 %v1628
    %v1772 = vpop.f32.mrb[0].mxu0
    %v1773 = vadd.f32 0.0, %v1772
    %v1774 = vpop.f32.mrb[0].mxu0
    %1775 = vdwg.mxu0
    %v1776 = vadd.f32 %v1632, %v1702
    %v1777 = vadd.f32 %v1633, %v1704
    %v1778 = vxor.u32 %v1776, 2147483648
    %v1779 = vxor.u32 %v1777, 2147483648
    %v1780 = vmul.f32 %v1778, 1.442695
    %v1781 = vpow.pop %v1780
    %v1782 = vmul.f32 %v1779, 1.442695
    %v1783 = vpow.pop %v1782
    %v1784 = vadd.f32 %v1781, 1.0
    %v1785 = vadd.f32 %v1783, 1.0
    %v1786 = vrcp.pop %v1784
    %v1787 = vmul.f32 1.0, %v1786
    %v1788 = vrcp.pop %v1785
    %v1789 = vmul.f32 1.0, %v1788
    %v1790 = vadd.f32 %v1773, %v455
    %v1791 = vmul.f32 %v1787, %v1790
    %v1792 = vadd.f32 %v1634, %v1791
    %v1793 = vtanh.pop %v1792
    %v1794 = vsub.f32 %v1628, %v1793
    %v1795 = vmul.f32 %v1789, %v1794
    %v1796 = vadd.f32 %v1793, %v1795
    %s1797 = scalar_lea.vmem [#allocation11], 56
    %1798 = vst [vmem:[%s1797] sm:$0xff] %v1796
    %1799 = vst [vmem:[#allocation12] sm:$0xff] %v1796
    // Predicated region
    $region42: #{tpu_custom_call.1} parent=1 // pred_check
      _
    $region43: #{tpu_custom_call.1} parent=1 // pred_check_branch
      %1801 = sbr.rel (0) target = $region45
    $region44: #{tpu_custom_call.1} parent=1 // pred_region
      %s1803 = ssub.s32 1024, 1024
      %1804 = vsyncadd [#allocation5], %s1803
      %s1805 = sshll.u32 [#allocation11], 4
      %s1806 = int_to_ptr.vmem [resolvable:$true] %s1805
      %1811 = dma.vmem_to_hbm [thread:$0]  %s1806, 1024, %s6, [#allocation5], 128, 128, 8
    $region45: #{tpu_custom_call.1} parent=1 // pred_fallthru
      _
    // Predicated region
    $region46: #{tpu_custom_call.1} parent=1 // pred_check
      _
    $region47: #{tpu_custom_call.1} parent=1 // pred_check_branch
      %1813 = sbr.rel (0) target = $region49
    $region48: #{tpu_custom_call.1} parent=1 // pred_region
      %s1815 = ssub.s32 128, 128
      %1816 = vsyncadd [#allocation13], %s1815
      %s1818 = sshll.u32 [#allocation12], 4
      %s1819 = int_to_ptr.vmem [resolvable:$true] %s1818
      %1821 = dma.vmem_to_hbm [thread:$0]  %s1819, 128, %s7, [#allocation13]
    $region49: #{tpu_custom_call.1} parent=1 // pred_fallthru
      _
    // Predicated region
    $region50: #{tpu_custom_call.1} parent=1 // pred_check
      _
    $region51: #{tpu_custom_call.1} parent=1 // pred_check_branch
      %1823 = sbr.rel (0) target = $region53
    $region52: #{tpu_custom_call.1} parent=1 // pred_region
      %1824 = dma.done [#allocation5], 1024
    $region53: #{tpu_custom_call.1} parent=1 // pred_fallthru
      _
    // Predicated region
    $region54: #{tpu_custom_call.1} parent=1 // pred_check
      _
    $region55: #{tpu_custom_call.1} parent=1 // pred_check_branch
      %1826 = sbr.rel (0) target = $region57
    $region56: #{tpu_custom_call.1} parent=1 // pred_region
      %1827 = dma.done [#allocation13], 128
    $region57: #{tpu_custom_call.1} parent=1 // pred_fallthru
      _
    %1828 = vsyncpa [#allocation4], 1
    %1829 = vsyncpa [#allocation7], 1
    %1830 = vsyncpa [#allocation10], 1
    %1831 = vsyncpa [#allocation5], 1
    %1832 = vsyncpa [#allocation13], 1

</llo_original>
